<compile_context>
chip_gen: v7x
topology: tpu7x:2x2x1
jax: 0.10.0
libtpu: 0.0.40
codegen_flags: <defaults>
</compile_context>

<pallas_src>
import functools

import jax
import jax.numpy as jnp
from jax import lax
from jax.experimental import pallas as pl
from jax.experimental.pallas import tpu as pltpu


def _upsample_conv_kernel(x_ref, uw_ref, wmat_ref, mask_ref, b_ref, o_ref,
                          xbig_ref, col_ref):
    """One batch element per grid step.

    x_ref:    (1, Cin, H0, W0)   original-resolution input tile (NCHW)
    uw_ref:   (W0, W)            one-hot nearest width-upsample matrix
    wmat_ref: (Cout, K*K*Cin)    conv weights, tap-major
    mask_ref: (K, 1, H*W)        per-kw row-seam masks (horizontal zero pad)
    b_ref:    (Cout, 1)          bias
    o_ref:    (1, Cout, H*W)     output, lane-dense NCHW (flattened spatial)
    xbig_ref: (Cin, H*W + 2*margin) VMEM: flat upsampled image w/ zero margins
    col_ref:  (K*K*Cin, H*W)     VMEM: im2col staging for the fused contraction
    """
    _, Cin, H0, W0 = x_ref.shape
    W = uw_ref.shape[1]
    K = mask_ref.shape[0]
    Cout = wmat_ref.shape[0]
    HW = o_ref.shape[2]
    f = W // W0
    pad = (K - 1) // 2
    margin = pad * W + pad          # covers the largest |tap shift|

    # Zero margins = the conv's zero padding (vertical via margins, horizontal
    # via the per-kw masks below).
    xbig_ref[...] = jnp.zeros(xbig_ref.shape, xbig_ref.dtype)

    # Width upsample on the MXU: (Cin*H0, W0) @ one-hot (W0, W).
    xw = jnp.dot(
        x_ref[0].reshape(Cin * H0, W0).astype(jnp.float32),
        uw_ref[...],
        preferred_element_type=jnp.float32,
    ).reshape(Cin, H0, W)

    # Height upsample: write each width-upsampled row `f` times at its flat
    # offset (rows of the flat image are contiguous, stride W, no relayout).
    for i0 in range(H0):            # static unroll; H0 is small
        row = xw[:, i0, :]          # (Cin, W)
        for di in range(f):
            a = i0 * f + di         # upsampled row index
            start = margin + a * W
            xbig_ref[:, start:start + W] = row

    # im2col: every (kh, kw) tap is a lane-shifted view of the flat buffer;
    # the mask kills the row-seam wrap-around (horizontal zero padding).
    for kh in range(K):
        for kw in range(K):
            t = kh * K + kw
            s = (kh - pad) * W + (kw - pad)
            patch = xbig_ref[:, margin + s:margin + s + HW]     # (Cin, HW)
            col_ref[t * Cin:(t + 1) * Cin, :] = patch * mask_ref[kw]

    # Single fused contraction + bias; lane-dense store straight in NCHW order.
    acc = jnp.dot(wmat_ref[...], col_ref[...],
                  preferred_element_type=jnp.float32)           # (Cout, HW)
    acc = acc + b_ref[...]                                      # (Cout, 1) bcast
    o_ref[...] = acc.reshape(1, Cout, HW).astype(o_ref.dtype)


@functools.partial(jax.jit, static_argnames=("factor", "kernel_size"))
def interpolate_conv_upsample(x_nchw, w_oihw, bias, *, factor, kernel_size):
    """Forward of InterpolateConvUpsampleLayer (mode='nearest', stride=1, groups=1).

    x_nchw: (N, Cin, H0, W0)
    w_oihw: (Cout, Cin, K, K)
    bias:   (Cout,)
    returns (N, Cout, H0*factor, W0*factor)
    """
    N, Cin, H0, W0 = x_nchw.shape
    Cout = w_oihw.shape[0]
    K = kernel_size
    assert K % 2 == 1, "same-padding path assumes odd kernel_size"
    pad = (K - 1) // 2
    f = factor
    H, W = H0 * f, W0 * f
    HW = H * W
    margin = pad * W + pad
    l_big = HW + 2 * margin

    # Tiny constant operands (built once by XLA; no full-size HBM intermediates).
    uw = (jnp.arange(W)[None, :] // f == jnp.arange(W0)[:, None]
          ).astype(jnp.float32)                                     # (W0, W)
    col = jnp.arange(HW) % W
    masks = jnp.stack(
        [(col + kw - pad >= 0) & (col + kw - pad < W) for kw in range(K)]
    ).astype(jnp.float32).reshape(K, 1, HW)                         # (K, 1, HW)
    wmat = jnp.transpose(w_oihw, (0, 2, 3, 1)).reshape(
        Cout, K * K * Cin).astype(jnp.float32)                      # (Cout, K*K*Cin)
    b2 = bias.reshape(Cout, 1).astype(jnp.float32)

    out_flat = pl.pallas_call(
        _upsample_conv_kernel,
        out_shape=jax.ShapeDtypeStruct((N, Cout, HW), x_nchw.dtype),
        grid_spec=pltpu.PrefetchScalarGridSpec(
            num_scalar_prefetch=0,
            grid=(N,),
            in_specs=[
                pl.BlockSpec((1, Cin, H0, W0), lambda n: (n, 0, 0, 0)),
                pl.BlockSpec((W0, W), lambda n: (0, 0)),
                pl.BlockSpec((Cout, K * K * Cin), lambda n: (0, 0)),
                pl.BlockSpec((K, 1, HW), lambda n: (0, 0, 0)),
                pl.BlockSpec((Cout, 1), lambda n: (0, 0)),
            ],
            out_specs=pl.BlockSpec((1, Cout, HW), lambda n: (n, 0, 0)),
            scratch_shapes=[
                pltpu.VMEM((Cin, l_big), jnp.float32),          # flat padded image
                pltpu.VMEM((K * K * Cin, HW), jnp.float32),     # im2col staging
            ],
        ),
        compiler_params=pltpu.CompilerParams(
            dimension_semantics=("parallel",)),
    )(x_nchw, uw, wmat, masks, b2)

    # Free contiguous reshape — no transpose, output is already NCHW-ordered.
    return out_flat.reshape(N, Cout, H, W)


def _reference(x_nchw, w_oihw, bias, *, factor, kernel_size):
    """Pure-JAX reference matching PyTorch semantics."""
    pad = (kernel_size - 1) // 2
    x = jnp.repeat(x_nchw, factor, axis=2)
    x = jnp.repeat(x, factor, axis=3)
    out = lax.conv_general_dilated(
        x, w_oihw,
        window_strides=(1, 1),
        padding=((pad, pad), (pad, pad)),
        dimension_numbers=("NCHW", "OIHW", "NCHW"),
    )
    return out + bias.reshape(1, -1, 1, 1)


if __name__ == "__main__":
    # Module config
    in_channels, out_channels = 4, 8
    kernel_size, factor = 3, 2

    # Deterministic inputs / parameters
    key = jax.random.PRNGKey(0)
    kx, kw, kb = jax.random.split(key, 3)
    x = jax.random.normal(kx, (2, in_channels, 16, 16), dtype=jnp.float32)
    w = jax.random.normal(
        kw, (out_channels, in_channels, kernel_size, kernel_size),
        dtype=jnp.float32) * 0.1
    b = jax.random.normal(kb, (out_channels,), dtype=jnp.float32) * 0.1

    out = interpolate_conv_upsample(
        x, w, b, factor=factor, kernel_size=kernel_size)
    out = jax.block_until_ready(out)

    ref = _reference(x, w, b, factor=factor, kernel_size=kernel_size)
    assert out.shape == ref.shape == (2, out_channels, 32, 32), out.shape
    assert jnp.allclose(out, ref, atol=1e-4, rtol=1e-4), "mismatch vs reference"

    print("KERNEL_OK")
</pallas_src>

<mosaic_0001>
module attributes {stable_mosaic.version = 11 : i64} {
  func.func @_upsample_conv_kernel(%arg0: i32, %arg1: memref<1x4x16x16xf32, #tpu.memory_space<vmem>>, %arg2: memref<16x32xf32, #tpu.memory_space<vmem>>, %arg3: memref<8x36xf32, #tpu.memory_space<vmem>>, %arg4: memref<3x1x1024xf32, #tpu.memory_space<vmem>>, %arg5: memref<8x1xf32, #tpu.memory_space<vmem>>, %arg6: memref<1x8x1024xf32, #tpu.memory_space<vmem>>, %arg7: memref<4x1090xf32, #tpu.memory_space<vmem>>, %arg8: memref<36x1024xf32, #tpu.memory_space<vmem>>) attributes {dimension_semantics = [#tpu.dimension_semantics<parallel>], iteration_bounds = array<i64: 2>, scalar_prefetch = 0 : i64, scratch_operands = 2 : i64, tpu.core_type = #tpu.core_type<tc>, window_params = [{transform_indices = @transform_0, window_bounds = array<i64: 1, 4, 16, 16>}, {pipeline_mode = #tpu.pipeline_mode<synchronous>, transform_indices = @transform_1, window_bounds = array<i64: 16, 32>}, {pipeline_mode = #tpu.pipeline_mode<synchronous>, transform_indices = @transform_2, window_bounds = array<i64: 8, 36>}, {pipeline_mode = #tpu.pipeline_mode<synchronous>, transform_indices = @transform_3, window_bounds = array<i64: 3, 1, 1024>}, {pipeline_mode = #tpu.pipeline_mode<synchronous>, transform_indices = @transform_4, window_bounds = array<i64: 8, 1>}, {transform_indices = @transform_5, window_bounds = array<i64: 1, 8, 1024>}]} {
    %cst = arith.constant 0.000000e+00 : f32
    %0 = vector.broadcast %cst : f32 to vector<4x1090xf32>
    %c0 = arith.constant 0 : index
    %c0_0 = arith.constant 0 : index
    %1 = vector.load %arg7[%c0, %c0_0] : memref<4x1090xf32, #tpu.memory_space<vmem>>, vector<4x1090xf32>
    tpu.vector_store %arg7[%c0, %c0_0], %0 {strides = array<i32>} : memref<4x1090xf32, #tpu.memory_space<vmem>>, vector<4x1090xf32>,
    %c0_1 = arith.constant 0 : index
    %c0_2 = arith.constant 0 : index
    %c0_3 = arith.constant 0 : index
    %c0_4 = arith.constant 0 : index
    %2 = vector.load %arg1[%c0_1, %c0_2, %c0_3, %c0_4] : memref<1x4x16x16xf32, #tpu.memory_space<vmem>>, vector<1x4x16x16xf32>
    %3 = vector.shape_cast %2 : vector<1x4x16x16xf32> to vector<4x16x16xf32>
    %4 = vector.shape_cast %3 : vector<4x16x16xf32> to vector<64x16xf32>
    %c0_5 = arith.constant 0 : index
    %c0_6 = arith.constant 0 : index
    %5 = vector.load %arg2[%c0_5, %c0_6] : memref<16x32xf32, #tpu.memory_space<vmem>>, vector<16x32xf32>
    %cst_7 = arith.constant dense<0.000000e+00> : vector<64x32xf32>
    %6 = tpu.matmul %4, %5, %cst_7 {dimension_numbers = #tpu.dot_dimension_numbers<[1], [0], [0], [1], [0, 0, 1, 1], [], []>} : vector<64x16xf32>, vector<16x32xf32>, vector<64x32xf32> -> vector<64x32xf32>
    %7 = vector.shape_cast %6 : vector<64x32xf32> to vector<4x16x32xf32>
    %8 = vector.extract_strided_slice %7 {offsets = [0, 0, 0], sizes = [4, 1, 32], strides = [1, 1, 1]} : vector<4x16x32xf32> to vector<4x1x32xf32>
    %9 = vector.shape_cast %8 : vector<4x1x32xf32> to vector<4x32xf32>
    %c0_8 = arith.constant 0 : index
    %c33 = arith.constant 33 : index
    %10 = vector.load %arg7[%c0_8, %c33] : memref<4x1090xf32, #tpu.memory_space<vmem>>, vector<4x32xf32>
    tpu.vector_store %arg7[%c0_8, %c33], %9 {strides = array<i32>} : memref<4x1090xf32, #tpu.memory_space<vmem>>, vector<4x32xf32>,
    %c0_9 = arith.constant 0 : index
    %c65 = arith.constant 65 : index
    %11 = vector.load %arg7[%c0_9, %c65] : memref<4x1090xf32, #tpu.memory_space<vmem>>, vector<4x32xf32>
    tpu.vector_store %arg7[%c0_9, %c65], %9 {strides = array<i32>} : memref<4x1090xf32, #tpu.memory_space<vmem>>, vector<4x32xf32>,
    %12 = vector.extract_strided_slice %7 {offsets = [0, 1, 0], sizes = [4, 1, 32], strides = [1, 1, 1]} : vector<4x16x32xf32> to vector<4x1x32xf32>
    %13 = vector.shape_cast %12 : vector<4x1x32xf32> to vector<4x32xf32>
    %c0_10 = arith.constant 0 : index
    %c97 = arith.constant 97 : index
    %14 = vector.load %arg7[%c0_10, %c97] : memref<4x1090xf32, #tpu.memory_space<vmem>>, vector<4x32xf32>
    tpu.vector_store %arg7[%c0_10, %c97], %13 {strides = array<i32>} : memref<4x1090xf32, #tpu.memory_space<vmem>>, vector<4x32xf32>,
    %c0_11 = arith.constant 0 : index
    %c129 = arith.constant 129 : index
    %15 = vector.load %arg7[%c0_11, %c129] : memref<4x1090xf32, #tpu.memory_space<vmem>>, vector<4x32xf32>
    tpu.vector_store %arg7[%c0_11, %c129], %13 {strides = array<i32>} : memref<4x1090xf32, #tpu.memory_space<vmem>>, vector<4x32xf32>,
    %16 = vector.extract_strided_slice %7 {offsets = [0, 2, 0], sizes = [4, 1, 32], strides = [1, 1, 1]} : vector<4x16x32xf32> to vector<4x1x32xf32>
    %17 = vector.shape_cast %16 : vector<4x1x32xf32> to vector<4x32xf32>
    %c0_12 = arith.constant 0 : index
    %c161 = arith.constant 161 : index
    %18 = vector.load %arg7[%c0_12, %c161] : memref<4x1090xf32, #tpu.memory_space<vmem>>, vector<4x32xf32>
    tpu.vector_store %arg7[%c0_12, %c161], %17 {strides = array<i32>} : memref<4x1090xf32, #tpu.memory_space<vmem>>, vector<4x32xf32>,
    %c0_13 = arith.constant 0 : index
    %c193 = arith.constant 193 : index
    %19 = vector.load %arg7[%c0_13, %c193] : memref<4x1090xf32, #tpu.memory_space<vmem>>, vector<4x32xf32>
    tpu.vector_store %arg7[%c0_13, %c193], %17 {strides = array<i32>} : memref<4x1090xf32, #tpu.memory_space<vmem>>, vector<4x32xf32>,
    %20 = vector.extract_strided_slice %7 {offsets = [0, 3, 0], sizes = [4, 1, 32], strides = [1, 1, 1]} : vector<4x16x32xf32> to vector<4x1x32xf32>
    %21 = vector.shape_cast %20 : vector<4x1x32xf32> to vector<4x32xf32>
    %c0_14 = arith.constant 0 : index
    %c225 = arith.constant 225 : index
    %22 = vector.load %arg7[%c0_14, %c225] : memref<4x1090xf32, #tpu.memory_space<vmem>>, vector<4x32xf32>
    tpu.vector_store %arg7[%c0_14, %c225], %21 {strides = array<i32>} : memref<4x1090xf32, #tpu.memory_space<vmem>>, vector<4x32xf32>,
    %c0_15 = arith.constant 0 : index
    %c257 = arith.constant 257 : index
    %23 = vector.load %arg7[%c0_15, %c257] : memref<4x1090xf32, #tpu.memory_space<vmem>>, vector<4x32xf32>
    tpu.vector_store %arg7[%c0_15, %c257], %21 {strides = array<i32>} : memref<4x1090xf32, #tpu.memory_space<vmem>>, vector<4x32xf32>,
    %24 = vector.extract_strided_slice %7 {offsets = [0, 4, 0], sizes = [4, 1, 32], strides = [1, 1, 1]} : vector<4x16x32xf32> to vector<4x1x32xf32>
    %25 = vector.shape_cast %24 : vector<4x1x32xf32> to vector<4x32xf32>
    %c0_16 = arith.constant 0 : index
    %c289 = arith.constant 289 : index
    %26 = vector.load %arg7[%c0_16, %c289] : memref<4x1090xf32, #tpu.memory_space<vmem>>, vector<4x32xf32>
    tpu.vector_store %arg7[%c0_16, %c289], %25 {strides = array<i32>} : memref<4x1090xf32, #tpu.memory_space<vmem>>, vector<4x32xf32>,
    %c0_17 = arith.constant 0 : index
    %c321 = arith.constant 321 : index
    %27 = vector.load %arg7[%c0_17, %c321] : memref<4x1090xf32, #tpu.memory_space<vmem>>, vector<4x32xf32>
    tpu.vector_store %arg7[%c0_17, %c321], %25 {strides = array<i32>} : memref<4x1090xf32, #tpu.memory_space<vmem>>, vector<4x32xf32>,
    %28 = vector.extract_strided_slice %7 {offsets = [0, 5, 0], sizes = [4, 1, 32], strides = [1, 1, 1]} : vector<4x16x32xf32> to vector<4x1x32xf32>
    %29 = vector.shape_cast %28 : vector<4x1x32xf32> to vector<4x32xf32>
    %c0_18 = arith.constant 0 : index
    %c353 = arith.constant 353 : index
    %30 = vector.load %arg7[%c0_18, %c353] : memref<4x1090xf32, #tpu.memory_space<vmem>>, vector<4x32xf32>
    tpu.vector_store %arg7[%c0_18, %c353], %29 {strides = array<i32>} : memref<4x1090xf32, #tpu.memory_space<vmem>>, vector<4x32xf32>,
    %c0_19 = arith.constant 0 : index
    %c385 = arith.constant 385 : index
    %31 = vector.load %arg7[%c0_19, %c385] : memref<4x1090xf32, #tpu.memory_space<vmem>>, vector<4x32xf32>
    tpu.vector_store %arg7[%c0_19, %c385], %29 {strides = array<i32>} : memref<4x1090xf32, #tpu.memory_space<vmem>>, vector<4x32xf32>,
    %32 = vector.extract_strided_slice %7 {offsets = [0, 6, 0], sizes = [4, 1, 32], strides = [1, 1, 1]} : vector<4x16x32xf32> to vector<4x1x32xf32>
    %33 = vector.shape_cast %32 : vector<4x1x32xf32> to vector<4x32xf32>
    %c0_20 = arith.constant 0 : index
    %c417 = arith.constant 417 : index
    %34 = vector.load %arg7[%c0_20, %c417] : memref<4x1090xf32, #tpu.memory_space<vmem>>, vector<4x32xf32>
    tpu.vector_store %arg7[%c0_20, %c417], %33 {strides = array<i32>} : memref<4x1090xf32, #tpu.memory_space<vmem>>, vector<4x32xf32>,
    %c0_21 = arith.constant 0 : index
    %c449 = arith.constant 449 : index
    %35 = vector.load %arg7[%c0_21, %c449] : memref<4x1090xf32, #tpu.memory_space<vmem>>, vector<4x32xf32>
    tpu.vector_store %arg7[%c0_21, %c449], %33 {strides = array<i32>} : memref<4x1090xf32, #tpu.memory_space<vmem>>, vector<4x32xf32>,
    %36 = vector.extract_strided_slice %7 {offsets = [0, 7, 0], sizes = [4, 1, 32], strides = [1, 1, 1]} : vector<4x16x32xf32> to vector<4x1x32xf32>
    %37 = vector.shape_cast %36 : vector<4x1x32xf32> to vector<4x32xf32>
    %c0_22 = arith.constant 0 : index
    %c481 = arith.constant 481 : index
    %38 = vector.load %arg7[%c0_22, %c481] : memref<4x1090xf32, #tpu.memory_space<vmem>>, vector<4x32xf32>
    tpu.vector_store %arg7[%c0_22, %c481], %37 {strides = array<i32>} : memref<4x1090xf32, #tpu.memory_space<vmem>>, vector<4x32xf32>,
    %c0_23 = arith.constant 0 : index
    %c513 = arith.constant 513 : index
    %39 = vector.load %arg7[%c0_23, %c513] : memref<4x1090xf32, #tpu.memory_space<vmem>>, vector<4x32xf32>
    tpu.vector_store %arg7[%c0_23, %c513], %37 {strides = array<i32>} : memref<4x1090xf32, #tpu.memory_space<vmem>>, vector<4x32xf32>,
    %40 = vector.extract_strided_slice %7 {offsets = [0, 8, 0], sizes = [4, 1, 32], strides = [1, 1, 1]} : vector<4x16x32xf32> to vector<4x1x32xf32>
    %41 = vector.shape_cast %40 : vector<4x1x32xf32> to vector<4x32xf32>
    %c0_24 = arith.constant 0 : index
    %c545 = arith.constant 545 : index
    %42 = vector.load %arg7[%c0_24, %c545] : memref<4x1090xf32, #tpu.memory_space<vmem>>, vector<4x32xf32>
    tpu.vector_store %arg7[%c0_24, %c545], %41 {strides = array<i32>} : memref<4x1090xf32, #tpu.memory_space<vmem>>, vector<4x32xf32>,
    %c0_25 = arith.constant 0 : index
    %c577 = arith.constant 577 : index
    %43 = vector.load %arg7[%c0_25, %c577] : memref<4x1090xf32, #tpu.memory_space<vmem>>, vector<4x32xf32>
    tpu.vector_store %arg7[%c0_25, %c577], %41 {strides = array<i32>} : memref<4x1090xf32, #tpu.memory_space<vmem>>, vector<4x32xf32>,
    %44 = vector.extract_strided_slice %7 {offsets = [0, 9, 0], sizes = [4, 1, 32], strides = [1, 1, 1]} : vector<4x16x32xf32> to vector<4x1x32xf32>
    %45 = vector.shape_cast %44 : vector<4x1x32xf32> to vector<4x32xf32>
    %c0_26 = arith.constant 0 : index
    %c609 = arith.constant 609 : index
    %46 = vector.load %arg7[%c0_26, %c609] : memref<4x1090xf32, #tpu.memory_space<vmem>>, vector<4x32xf32>
    tpu.vector_store %arg7[%c0_26, %c609], %45 {strides = array<i32>} : memref<4x1090xf32, #tpu.memory_space<vmem>>, vector<4x32xf32>,
    %c0_27 = arith.constant 0 : index
    %c641 = arith.constant 641 : index
    %47 = vector.load %arg7[%c0_27, %c641] : memref<4x1090xf32, #tpu.memory_space<vmem>>, vector<4x32xf32>
    tpu.vector_store %arg7[%c0_27, %c641], %45 {strides = array<i32>} : memref<4x1090xf32, #tpu.memory_space<vmem>>, vector<4x32xf32>,
    %48 = vector.extract_strided_slice %7 {offsets = [0, 10, 0], sizes = [4, 1, 32], strides = [1, 1, 1]} : vector<4x16x32xf32> to vector<4x1x32xf32>
    %49 = vector.shape_cast %48 : vector<4x1x32xf32> to vector<4x32xf32>
    %c0_28 = arith.constant 0 : index
    %c673 = arith.constant 673 : index
    %50 = vector.load %arg7[%c0_28, %c673] : memref<4x1090xf32, #tpu.memory_space<vmem>>, vector<4x32xf32>
    tpu.vector_store %arg7[%c0_28, %c673], %49 {strides = array<i32>} : memref<4x1090xf32, #tpu.memory_space<vmem>>, vector<4x32xf32>,
    %c0_29 = arith.constant 0 : index
    %c705 = arith.constant 705 : index
    %51 = vector.load %arg7[%c0_29, %c705] : memref<4x1090xf32, #tpu.memory_space<vmem>>, vector<4x32xf32>
    tpu.vector_store %arg7[%c0_29, %c705], %49 {strides = array<i32>} : memref<4x1090xf32, #tpu.memory_space<vmem>>, vector<4x32xf32>,
    %52 = vector.extract_strided_slice %7 {offsets = [0, 11, 0], sizes = [4, 1, 32], strides = [1, 1, 1]} : vector<4x16x32xf32> to vector<4x1x32xf32>
    %53 = vector.shape_cast %52 : vector<4x1x32xf32> to vector<4x32xf32>
    %c0_30 = arith.constant 0 : index
    %c737 = arith.constant 737 : index
    %54 = vector.load %arg7[%c0_30, %c737] : memref<4x1090xf32, #tpu.memory_space<vmem>>, vector<4x32xf32>
    tpu.vector_store %arg7[%c0_30, %c737], %53 {strides = array<i32>} : memref<4x1090xf32, #tpu.memory_space<vmem>>, vector<4x32xf32>,
    %c0_31 = arith.constant 0 : index
    %c769 = arith.constant 769 : index
    %55 = vector.load %arg7[%c0_31, %c769] : memref<4x1090xf32, #tpu.memory_space<vmem>>, vector<4x32xf32>
    tpu.vector_store %arg7[%c0_31, %c769], %53 {strides = array<i32>} : memref<4x1090xf32, #tpu.memory_space<vmem>>, vector<4x32xf32>,
    %56 = vector.extract_strided_slice %7 {offsets = [0, 12, 0], sizes = [4, 1, 32], strides = [1, 1, 1]} : vector<4x16x32xf32> to vector<4x1x32xf32>
    %57 = vector.shape_cast %56 : vector<4x1x32xf32> to vector<4x32xf32>
    %c0_32 = arith.constant 0 : index
    %c801 = arith.constant 801 : index
    %58 = vector.load %arg7[%c0_32, %c801] : memref<4x1090xf32, #tpu.memory_space<vmem>>, vector<4x32xf32>
    tpu.vector_store %arg7[%c0_32, %c801], %57 {strides = array<i32>} : memref<4x1090xf32, #tpu.memory_space<vmem>>, vector<4x32xf32>,
    %c0_33 = arith.constant 0 : index
    %c833 = arith.constant 833 : index
    %59 = vector.load %arg7[%c0_33, %c833] : memref<4x1090xf32, #tpu.memory_space<vmem>>, vector<4x32xf32>
    tpu.vector_store %arg7[%c0_33, %c833], %57 {strides = array<i32>} : memref<4x1090xf32, #tpu.memory_space<vmem>>, vector<4x32xf32>,
    %60 = vector.extract_strided_slice %7 {offsets = [0, 13, 0], sizes = [4, 1, 32], strides = [1, 1, 1]} : vector<4x16x32xf32> to vector<4x1x32xf32>
    %61 = vector.shape_cast %60 : vector<4x1x32xf32> to vector<4x32xf32>
    %c0_34 = arith.constant 0 : index
    %c865 = arith.constant 865 : index
    %62 = vector.load %arg7[%c0_34, %c865] : memref<4x1090xf32, #tpu.memory_space<vmem>>, vector<4x32xf32>
    tpu.vector_store %arg7[%c0_34, %c865], %61 {strides = array<i32>} : memref<4x1090xf32, #tpu.memory_space<vmem>>, vector<4x32xf32>,
    %c0_35 = arith.constant 0 : index
    %c897 = arith.constant 897 : index
    %63 = vector.load %arg7[%c0_35, %c897] : memref<4x1090xf32, #tpu.memory_space<vmem>>, vector<4x32xf32>
    tpu.vector_store %arg7[%c0_35, %c897], %61 {strides = array<i32>} : memref<4x1090xf32, #tpu.memory_space<vmem>>, vector<4x32xf32>,
    %64 = vector.extract_strided_slice %7 {offsets = [0, 14, 0], sizes = [4, 1, 32], strides = [1, 1, 1]} : vector<4x16x32xf32> to vector<4x1x32xf32>
    %65 = vector.shape_cast %64 : vector<4x1x32xf32> to vector<4x32xf32>
    %c0_36 = arith.constant 0 : index
    %c929 = arith.constant 929 : index
    %66 = vector.load %arg7[%c0_36, %c929] : memref<4x1090xf32, #tpu.memory_space<vmem>>, vector<4x32xf32>
    tpu.vector_store %arg7[%c0_36, %c929], %65 {strides = array<i32>} : memref<4x1090xf32, #tpu.memory_space<vmem>>, vector<4x32xf32>,
    %c0_37 = arith.constant 0 : index
    %c961 = arith.constant 961 : index
    %67 = vector.load %arg7[%c0_37, %c961] : memref<4x1090xf32, #tpu.memory_space<vmem>>, vector<4x32xf32>
    tpu.vector_store %arg7[%c0_37, %c961], %65 {strides = array<i32>} : memref<4x1090xf32, #tpu.memory_space<vmem>>, vector<4x32xf32>,
    %68 = vector.extract_strided_slice %7 {offsets = [0, 15, 0], sizes = [4, 1, 32], strides = [1, 1, 1]} : vector<4x16x32xf32> to vector<4x1x32xf32>
    %69 = vector.shape_cast %68 : vector<4x1x32xf32> to vector<4x32xf32>
    %c0_38 = arith.constant 0 : index
    %c993 = arith.constant 993 : index
    %70 = vector.load %arg7[%c0_38, %c993] : memref<4x1090xf32, #tpu.memory_space<vmem>>, vector<4x32xf32>
    tpu.vector_store %arg7[%c0_38, %c993], %69 {strides = array<i32>} : memref<4x1090xf32, #tpu.memory_space<vmem>>, vector<4x32xf32>,
    %c0_39 = arith.constant 0 : index
    %c1025 = arith.constant 1025 : index
    %71 = vector.load %arg7[%c0_39, %c1025] : memref<4x1090xf32, #tpu.memory_space<vmem>>, vector<4x32xf32>
    tpu.vector_store %arg7[%c0_39, %c1025], %69 {strides = array<i32>} : memref<4x1090xf32, #tpu.memory_space<vmem>>, vector<4x32xf32>,
    %c0_40 = arith.constant 0 : index
    %c0_41 = arith.constant 0 : index
    %72 = vector.load %arg7[%c0_40, %c0_41] : memref<4x1090xf32, #tpu.memory_space<vmem>>, vector<4x1024xf32>
    %c0_42 = arith.constant 0 : index
    %c0_43 = arith.constant 0 : index
    %c0_44 = arith.constant 0 : index
    %73 = vector.load %arg4[%c0_42, %c0_43, %c0_44] : memref<3x1x1024xf32, #tpu.memory_space<vmem>>, vector<1x1x1024xf32>
    %74 = vector.shape_cast %73 : vector<1x1x1024xf32> to vector<1x1024xf32>
    %75 = vector.broadcast %74 : vector<1x1024xf32> to vector<4x1024xf32>
    %76 = arith.mulf %72, %75 : vector<4x1024xf32>
    %c0_45 = arith.constant 0 : index
    %c0_46 = arith.constant 0 : index
    %77 = vector.load %arg8[%c0_45, %c0_46] : memref<36x1024xf32, #tpu.memory_space<vmem>>, vector<4x1024xf32>
    tpu.vector_store %arg8[%c0_45, %c0_46], %76 {strides = array<i32>} : memref<36x1024xf32, #tpu.memory_space<vmem>>, vector<4x1024xf32>,
    %c0_47 = arith.constant 0 : index
    %c1 = arith.constant 1 : index
    %78 = vector.load %arg7[%c0_47, %c1] : memref<4x1090xf32, #tpu.memory_space<vmem>>, vector<4x1024xf32>
    %c1_48 = arith.constant 1 : index
    %c0_49 = arith.constant 0 : index
    %c0_50 = arith.constant 0 : index
    %79 = vector.load %arg4[%c1_48, %c0_49, %c0_50] : memref<3x1x1024xf32, #tpu.memory_space<vmem>>, vector<1x1x1024xf32>
    %80 = vector.shape_cast %79 : vector<1x1x1024xf32> to vector<1x1024xf32>
    %81 = vector.broadcast %80 : vector<1x1024xf32> to vector<4x1024xf32>
    %82 = arith.mulf %78, %81 : vector<4x1024xf32>
    %c4 = arith.constant 4 : index
    %c0_51 = arith.constant 0 : index
    %83 = vector.load %arg8[%c4, %c0_51] : memref<36x1024xf32, #tpu.memory_space<vmem>>, vector<4x1024xf32>
    tpu.vector_store %arg8[%c4, %c0_51], %82 {strides = array<i32>} : memref<36x1024xf32, #tpu.memory_space<vmem>>, vector<4x1024xf32>,
    %c0_52 = arith.constant 0 : index
    %c2 = arith.constant 2 : index
    %84 = vector.load %arg7[%c0_52, %c2] : memref<4x1090xf32, #tpu.memory_space<vmem>>, vector<4x1024xf32>
    %c2_53 = arith.constant 2 : index
    %c0_54 = arith.constant 0 : index
    %c0_55 = arith.constant 0 : index
    %85 = vector.load %arg4[%c2_53, %c0_54, %c0_55] : memref<3x1x1024xf32, #tpu.memory_space<vmem>>, vector<1x1x1024xf32>
    %86 = vector.shape_cast %85 : vector<1x1x1024xf32> to vector<1x1024xf32>
    %87 = vector.broadcast %86 : vector<1x1024xf32> to vector<4x1024xf32>
    %88 = arith.mulf %84, %87 : vector<4x1024xf32>
    %c8 = arith.constant 8 : index
    %c0_56 = arith.constant 0 : index
    %89 = vector.load %arg8[%c8, %c0_56] : memref<36x1024xf32, #tpu.memory_space<vmem>>, vector<4x1024xf32>
    tpu.vector_store %arg8[%c8, %c0_56], %88 {strides = array<i32>} : memref<36x1024xf32, #tpu.memory_space<vmem>>, vector<4x1024xf32>,
    %c0_57 = arith.constant 0 : index
    %c32 = arith.constant 32 : index
    %90 = vector.load %arg7[%c0_57, %c32] : memref<4x1090xf32, #tpu.memory_space<vmem>>, vector<4x1024xf32>
    %c0_58 = arith.constant 0 : index
    %c0_59 = arith.constant 0 : index
    %c0_60 = arith.constant 0 : index
    %91 = vector.load %arg4[%c0_58, %c0_59, %c0_60] : memref<3x1x1024xf32, #tpu.memory_space<vmem>>, vector<1x1x1024xf32>
    %92 = vector.shape_cast %91 : vector<1x1x1024xf32> to vector<1x1024xf32>
    %93 = vector.broadcast %92 : vector<1x1024xf32> to vector<4x1024xf32>
    %94 = arith.mulf %90, %93 : vector<4x1024xf32>
    %c12 = arith.constant 12 : index
    %c0_61 = arith.constant 0 : index
    %95 = vector.load %arg8[%c12, %c0_61] : memref<36x1024xf32, #tpu.memory_space<vmem>>, vector<4x1024xf32>
    tpu.vector_store %arg8[%c12, %c0_61], %94 {strides = array<i32>} : memref<36x1024xf32, #tpu.memory_space<vmem>>, vector<4x1024xf32>,
    %c0_62 = arith.constant 0 : index
    %c33_63 = arith.constant 33 : index
    %96 = vector.load %arg7[%c0_62, %c33_63] : memref<4x1090xf32, #tpu.memory_space<vmem>>, vector<4x1024xf32>
    %c1_64 = arith.constant 1 : index
    %c0_65 = arith.constant 0 : index
    %c0_66 = arith.constant 0 : index
    %97 = vector.load %arg4[%c1_64, %c0_65, %c0_66] : memref<3x1x1024xf32, #tpu.memory_space<vmem>>, vector<1x1x1024xf32>
    %98 = vector.shape_cast %97 : vector<1x1x1024xf32> to vector<1x1024xf32>
    %99 = vector.broadcast %98 : vector<1x1024xf32> to vector<4x1024xf32>
    %100 = arith.mulf %96, %99 : vector<4x1024xf32>
    %c16 = arith.constant 16 : index
    %c0_67 = arith.constant 0 : index
    %101 = vector.load %arg8[%c16, %c0_67] : memref<36x1024xf32, #tpu.memory_space<vmem>>, vector<4x1024xf32>
    tpu.vector_store %arg8[%c16, %c0_67], %100 {strides = array<i32>} : memref<36x1024xf32, #tpu.memory_space<vmem>>, vector<4x1024xf32>,
    %c0_68 = arith.constant 0 : index
    %c34 = arith.constant 34 : index
    %102 = vector.load %arg7[%c0_68, %c34] : memref<4x1090xf32, #tpu.memory_space<vmem>>, vector<4x1024xf32>
    %c2_69 = arith.constant 2 : index
    %c0_70 = arith.constant 0 : index
    %c0_71 = arith.constant 0 : index
    %103 = vector.load %arg4[%c2_69, %c0_70, %c0_71] : memref<3x1x1024xf32, #tpu.memory_space<vmem>>, vector<1x1x1024xf32>
    %104 = vector.shape_cast %103 : vector<1x1x1024xf32> to vector<1x1024xf32>
    %105 = vector.broadcast %104 : vector<1x1024xf32> to vector<4x1024xf32>
    %106 = arith.mulf %102, %105 : vector<4x1024xf32>
    %c20 = arith.constant 20 : index
    %c0_72 = arith.constant 0 : index
    %107 = vector.load %arg8[%c20, %c0_72] : memref<36x1024xf32, #tpu.memory_space<vmem>>, vector<4x1024xf32>
    tpu.vector_store %arg8[%c20, %c0_72], %106 {strides = array<i32>} : memref<36x1024xf32, #tpu.memory_space<vmem>>, vector<4x1024xf32>,
    %c0_73 = arith.constant 0 : index
    %c64 = arith.constant 64 : index
    %108 = vector.load %arg7[%c0_73, %c64] : memref<4x1090xf32, #tpu.memory_space<vmem>>, vector<4x1024xf32>
    %c0_74 = arith.constant 0 : index
    %c0_75 = arith.constant 0 : index
    %c0_76 = arith.constant 0 : index
    %109 = vector.load %arg4[%c0_74, %c0_75, %c0_76] : memref<3x1x1024xf32, #tpu.memory_space<vmem>>, vector<1x1x1024xf32>
    %110 = vector.shape_cast %109 : vector<1x1x1024xf32> to vector<1x1024xf32>
    %111 = vector.broadcast %110 : vector<1x1024xf32> to vector<4x1024xf32>
    %112 = arith.mulf %108, %111 : vector<4x1024xf32>
    %c24 = arith.constant 24 : index
    %c0_77 = arith.constant 0 : index
    %113 = vector.load %arg8[%c24, %c0_77] : memref<36x1024xf32, #tpu.memory_space<vmem>>, vector<4x1024xf32>
    tpu.vector_store %arg8[%c24, %c0_77], %112 {strides = array<i32>} : memref<36x1024xf32, #tpu.memory_space<vmem>>, vector<4x1024xf32>,
    %c0_78 = arith.constant 0 : index
    %c65_79 = arith.constant 65 : index
    %114 = vector.load %arg7[%c0_78, %c65_79] : memref<4x1090xf32, #tpu.memory_space<vmem>>, vector<4x1024xf32>
    %c1_80 = arith.constant 1 : index
    %c0_81 = arith.constant 0 : index
    %c0_82 = arith.constant 0 : index
    %115 = vector.load %arg4[%c1_80, %c0_81, %c0_82] : memref<3x1x1024xf32, #tpu.memory_space<vmem>>, vector<1x1x1024xf32>
    %116 = vector.shape_cast %115 : vector<1x1x1024xf32> to vector<1x1024xf32>
    %117 = vector.broadcast %116 : vector<1x1024xf32> to vector<4x1024xf32>
    %118 = arith.mulf %114, %117 : vector<4x1024xf32>
    %c28 = arith.constant 28 : index
    %c0_83 = arith.constant 0 : index
    %119 = vector.load %arg8[%c28, %c0_83] : memref<36x1024xf32, #tpu.memory_space<vmem>>, vector<4x1024xf32>
    tpu.vector_store %arg8[%c28, %c0_83], %118 {strides = array<i32>} : memref<36x1024xf32, #tpu.memory_space<vmem>>, vector<4x1024xf32>,
    %c0_84 = arith.constant 0 : index
    %c66 = arith.constant 66 : index
    %120 = vector.load %arg7[%c0_84, %c66] : memref<4x1090xf32, #tpu.memory_space<vmem>>, vector<4x1024xf32>
    %c2_85 = arith.constant 2 : index
    %c0_86 = arith.constant 0 : index
    %c0_87 = arith.constant 0 : index
    %121 = vector.load %arg4[%c2_85, %c0_86, %c0_87] : memref<3x1x1024xf32, #tpu.memory_space<vmem>>, vector<1x1x1024xf32>
    %122 = vector.shape_cast %121 : vector<1x1x1024xf32> to vector<1x1024xf32>
    %123 = vector.broadcast %122 : vector<1x1024xf32> to vector<4x1024xf32>
    %124 = arith.mulf %120, %123 : vector<4x1024xf32>
    %c32_88 = arith.constant 32 : index
    %c0_89 = arith.constant 0 : index
    %125 = vector.load %arg8[%c32_88, %c0_89] : memref<36x1024xf32, #tpu.memory_space<vmem>>, vector<4x1024xf32>
    tpu.vector_store %arg8[%c32_88, %c0_89], %124 {strides = array<i32>} : memref<36x1024xf32, #tpu.memory_space<vmem>>, vector<4x1024xf32>,
    %c0_90 = arith.constant 0 : index
    %c0_91 = arith.constant 0 : index
    %126 = vector.load %arg3[%c0_90, %c0_91] : memref<8x36xf32, #tpu.memory_space<vmem>>, vector<8x36xf32>
    %c0_92 = arith.constant 0 : index
    %c0_93 = arith.constant 0 : index
    %127 = vector.load %arg8[%c0_92, %c0_93] : memref<36x1024xf32, #tpu.memory_space<vmem>>, vector<36x1024xf32>
    %cst_94 = arith.constant dense<0.000000e+00> : vector<8x1024xf32>
    %128 = tpu.matmul %126, %127, %cst_94 {dimension_numbers = #tpu.dot_dimension_numbers<[1], [0], [0], [1], [0, 0, 1, 1], [], []>} : vector<8x36xf32>, vector<36x1024xf32>, vector<8x1024xf32> -> vector<8x1024xf32>
    %c0_95 = arith.constant 0 : index
    %c0_96 = arith.constant 0 : index
    %129 = vector.load %arg5[%c0_95, %c0_96] : memref<8x1xf32, #tpu.memory_space<vmem>>, vector<8x1xf32>
    %130 = vector.broadcast %129 : vector<8x1xf32> to vector<8x1024xf32>
    %131 = arith.addf %128, %130 : vector<8x1024xf32>
    %132 = vector.shape_cast %131 : vector<8x1024xf32> to vector<1x8x1024xf32>
    %c0_97 = arith.constant 0 : index
    %c0_98 = arith.constant 0 : index
    %c0_99 = arith.constant 0 : index
    %133 = vector.load %arg6[%c0_97, %c0_98, %c0_99] : memref<1x8x1024xf32, #tpu.memory_space<vmem>>, vector<1x8x1024xf32>
    tpu.vector_store %arg6[%c0_97, %c0_98, %c0_99], %132 {strides = array<i32>} : memref<1x8x1024xf32, #tpu.memory_space<vmem>>, vector<1x8x1024xf32>,
    return
  }
  func.func @transform_0(%arg0: i32) -> (i32, i32, i32, i32) {
    %c0_i32 = arith.constant 0 : i32
    %c0_i32_0 = arith.constant 0 : i32
    %c0_i32_1 = arith.constant 0 : i32
    %c0_i32_2 = arith.constant 0 : i32
    return %arg0, %c0_i32, %c0_i32_0, %c0_i32_1 : i32, i32, i32, i32
  }
  func.func @transform_1(%arg0: i32) -> (i32, i32) {
    %c0_i32 = arith.constant 0 : i32
    %c0_i32_0 = arith.constant 0 : i32
    %c0_i32_1 = arith.constant 0 : i32
    return %c0_i32, %c0_i32_0 : i32, i32
  }
  func.func @transform_2(%arg0: i32) -> (i32, i32) {
    %c0_i32 = arith.constant 0 : i32
    %c0_i32_0 = arith.constant 0 : i32
    %c0_i32_1 = arith.constant 0 : i32
    return %c0_i32, %c0_i32_0 : i32, i32
  }
  func.func @transform_3(%arg0: i32) -> (i32, i32, i32) {
    %c0_i32 = arith.constant 0 : i32
    %c0_i32_0 = arith.constant 0 : i32
    %c0_i32_1 = arith.constant 0 : i32
    %c0_i32_2 = arith.constant 0 : i32
    return %c0_i32, %c0_i32_0, %c0_i32_1 : i32, i32, i32
  }
  func.func @transform_4(%arg0: i32) -> (i32, i32) {
    %c0_i32 = arith.constant 0 : i32
    %c0_i32_0 = arith.constant 0 : i32
    %c0_i32_1 = arith.constant 0 : i32
    return %c0_i32, %c0_i32_0 : i32, i32
  }
  func.func @transform_5(%arg0: i32) -> (i32, i32, i32) {
    %c0_i32 = arith.constant 0 : i32
    %c0_i32_0 = arith.constant 0 : i32
    %c0_i32_1 = arith.constant 0 : i32
    return %arg0, %c0_i32, %c0_i32_0 : i32, i32, i32
  }
}

</mosaic_0001>

<llo_original>
// kernel: interpolate_conv_upsample.1
$region0: #{interpolate_conv_upsample.1}
  #allocation0 [shape = 'u32[]', space=smem, size = 0x4, offset = 0x4, fixed_abs, tag = 'smem constant byte address 0x4 - core index']
  #allocation1 [shape = 'u32[144,128]{1,0:T(1,128)}', space=vmem, size = 0x12000, scoped, tag = 'internal scratch']
  #allocation2 [shape = 'f32[4,1090]{1,0:T(4,128)}', space=vmem, size = 0x4800, scoped, tag = 'scratch operand']
  #allocation3 [shape = 'f32[36,1024]{1,0:T(8,128)}', space=vmem, size = 0x28000, scoped, tag = 'scratch operand']
  %s0 = inlined_call_operand.vmem [shape: f32[2,4,16,16], index: 0, kind: input, shape index: {}]
  %s1 = inlined_call_operand.vmem [shape: f32[16,32], index: 1, kind: input, shape index: {}]
  %s2 = inlined_call_operand.vmem [shape: f32[8,36], index: 2, kind: input, shape index: {}]
  %s3 = inlined_call_operand.vmem [shape: f32[3,1,1024], index: 3, kind: input, shape index: {}]
  %s4 = inlined_call_operand.vmem [shape: f32[8,1], index: 4, kind: input, shape index: {}]
  %s5 = inlined_call_operand.vmem [shape: f32[2,8,1024], index: 5, kind: output, shape index: {}]
  %s6 = sld [smem:[#allocation0]]
  $region53: #{interpolate_conv_upsample.1} parent=0
    _
  %s8 = ssub.s32 1, %s6
  %s9 = scalar_select 0, %s8, %s6
  loop: start=0, step=1, limit=4
  $region2: #{interpolate_conv_upsample.1} parent=0 // loop_pre_header
    _
  $region3: #{interpolate_conv_upsample.1} parent=0 // loop_header
    %s11 = sphi 0, %s15
    %p12 = scmp.ge.s32.totalorder %s11, 4
    %s21 = sphi 0, %s23
    %s24 = sphi 0, %s21
    %s25 = sphi 0, %s24
    %s41 = sphi 0, %s25
    %s45 = sphi 0, %s45
    %s47 = sphi 0, %s45
    %s48 = sphi 0, %s47
    %s62 = sphi 0, %s48
    %s66 = sphi 0, %s66
    %s68 = sphi 0, %s66
    %s69 = sphi 0, %s68
    %s83 = sphi 0, %s69
    %s87 = sphi 0, %s87
    %s89 = sphi 0, %s87
    %s90 = sphi 0, %s89
    %s104 = sphi 0, %s90
    %s108 = sphi 0, %s108
    %s110 = sphi 0, %s108
    %s111 = sphi 0, %s110
    %s125 = sphi 0, %s111
    %s131 = sphi 0, %s133
    %s134 = sphi 0, %s131
    %s135 = sphi 0, %s134
    %s151 = sphi 0, %s135
  $region4: #{interpolate_conv_upsample.1} parent=0 // loop_header_branch
    %14 = sbr.rel (%p12) target = $region8
  $region5: #{interpolate_conv_upsample.1} parent=0 // loop_body
    %s16 = ssub.s32 %s11, 1
    %s17 = ssub.s32 %s11, 2
    %s18 = sadd.s32 %s11, 1
    %s19 = ssub.s32 %s11, %s18
    %p20 = scmp.eq.s32.totalorder %s19, 0
    %s22 = sadd.s32 %s21, 1
    %s23 = scalar_select %p20, %s21, %s22
    %p26 = pneg %p20
    %p27 = scmp.eq.s32.totalorder %s11, 1
    %p28 = por %p26, %p27
    %p29 = scmp.ne.s32.totalorder %s21, %s24
    %p30 = scmp.eq.s32.totalorder %s11, 0
    %p31 = por %p29, %p30
    %p32 = scmp.ne.s32.totalorder %s21, %s24
    %p33 = scmp.eq.s32.totalorder %s16, 1
    %p34 = por %p32, %p33
    %p35 = scmp.ne.s32.totalorder %s24, %s25
    %p36 = scmp.eq.s32.totalorder %s16, 0
    %p37 = por %p35, %p36
    %p38 = scmp.ne.s32.totalorder %s24, %s25
    %p39 = scmp.eq.s32.totalorder %s17, 1
    %p40 = por %p38, %p39
    %p42 = scmp.ne.s32.totalorder %s25, %s41
    %p43 = scmp.eq.s32.totalorder %s17, 0
    %p44 = por %p42, %p43
    %s46 = sadd.s32 %s45, 1
    %p49 = scmp.eq.s32.totalorder %s11, 1
    %p50 = scmp.ne.s32.totalorder %s45, %s47
    %p51 = scmp.eq.s32.totalorder %s11, 0
    %p52 = por %p50, %p51
    %p53 = scmp.ne.s32.totalorder %s45, %s47
    %p54 = scmp.eq.s32.totalorder %s16, 1
    %p55 = por %p53, %p54
    %p56 = scmp.ne.s32.totalorder %s47, %s48
    %p57 = scmp.eq.s32.totalorder %s16, 0
    %p58 = por %p56, %p57
    %p59 = scmp.ne.s32.totalorder %s47, %s48
    %p60 = scmp.eq.s32.totalorder %s17, 1
    %p61 = por %p59, %p60
    %p63 = scmp.ne.s32.totalorder %s48, %s62
    %p64 = scmp.eq.s32.totalorder %s17, 0
    %p65 = por %p63, %p64
    %s67 = sadd.s32 %s66, 1
    %p70 = scmp.eq.s32.totalorder %s11, 1
    %p71 = scmp.ne.s32.totalorder %s66, %s68
    %p72 = scmp.eq.s32.totalorder %s11, 0
    %p73 = por %p71, %p72
    %p74 = scmp.ne.s32.totalorder %s66, %s68
    %p75 = scmp.eq.s32.totalorder %s16, 1
    %p76 = por %p74, %p75
    %p77 = scmp.ne.s32.totalorder %s68, %s69
    %p78 = scmp.eq.s32.totalorder %s16, 0
    %p79 = por %p77, %p78
    %p80 = scmp.ne.s32.totalorder %s68, %s69
    %p81 = scmp.eq.s32.totalorder %s17, 1
    %p82 = por %p80, %p81
    %p84 = scmp.ne.s32.totalorder %s69, %s83
    %p85 = scmp.eq.s32.totalorder %s17, 0
    %p86 = por %p84, %p85
    %s88 = sadd.s32 %s87, 1
    %p91 = scmp.eq.s32.totalorder %s11, 1
    %p92 = scmp.ne.s32.totalorder %s87, %s89
    %p93 = scmp.eq.s32.totalorder %s11, 0
    %p94 = por %p92, %p93
    %p95 = scmp.ne.s32.totalorder %s87, %s89
    %p96 = scmp.eq.s32.totalorder %s16, 1
    %p97 = por %p95, %p96
    %p98 = scmp.ne.s32.totalorder %s89, %s90
    %p99 = scmp.eq.s32.totalorder %s16, 0
    %p100 = por %p98, %p99
    %p101 = scmp.ne.s32.totalorder %s89, %s90
    %p102 = scmp.eq.s32.totalorder %s17, 1
    %p103 = por %p101, %p102
    %p105 = scmp.ne.s32.totalorder %s90, %s104
    %p106 = scmp.eq.s32.totalorder %s17, 0
    %p107 = por %p105, %p106
    %s109 = sadd.s32 %s108, 1
    %p112 = scmp.eq.s32.totalorder %s11, 1
    %p113 = scmp.ne.s32.totalorder %s108, %s110
    %p114 = scmp.eq.s32.totalorder %s11, 0
    %p115 = por %p113, %p114
    %p116 = scmp.ne.s32.totalorder %s108, %s110
    %p117 = scmp.eq.s32.totalorder %s16, 1
    %p118 = por %p116, %p117
    %p119 = scmp.ne.s32.totalorder %s110, %s111
    %p120 = scmp.eq.s32.totalorder %s16, 0
    %p121 = por %p119, %p120
    %p122 = scmp.ne.s32.totalorder %s110, %s111
    %p123 = scmp.eq.s32.totalorder %s17, 1
    %p124 = por %p122, %p123
    %p126 = scmp.ne.s32.totalorder %s111, %s125
    %p127 = scmp.eq.s32.totalorder %s17, 0
    %p128 = por %p126, %p127
    %s129 = ssub.s32 %s11, %s18
    %p130 = scmp.eq.s32.totalorder %s129, 0
    %s132 = sadd.s32 %s131, 1
    %s133 = scalar_select %p130, %s131, %s132
    %p136 = pneg %p130
    %p137 = scmp.eq.s32.totalorder %s11, 1
    %p138 = por %p136, %p137
    %p139 = scmp.ne.s32.totalorder %s131, %s134
    %p140 = scmp.eq.s32.totalorder %s11, 0
    %p141 = por %p139, %p140
    %p142 = scmp.ne.s32.totalorder %s131, %s134
    %p143 = scmp.eq.s32.totalorder %s16, 1
    %p144 = por %p142, %p143
    %p145 = scmp.ne.s32.totalorder %s134, %s135
    %p146 = scmp.eq.s32.totalorder %s16, 0
    %p147 = por %p145, %p146
    %p148 = scmp.ne.s32.totalorder %s134, %s135
    %p149 = scmp.eq.s32.totalorder %s17, 1
    %p150 = por %p148, %p149
    %p152 = scmp.ne.s32.totalorder %s135, %s151
    %p153 = scmp.eq.s32.totalorder %s17, 0
    %p154 = por %p152, %p153
    %p155 = scmp.le.s32.totalorder 1, %s11
    %p156 = scmp.lt.s32.totalorder %s11, 3
    %p157 = pnand %p155, %p156
    %p158 = pneg %p157
    // Predicated region
    $region9: #{interpolate_conv_upsample.1} parent=5 // pred_check
      _
    $region10: #{interpolate_conv_upsample.1} parent=5 // pred_check_branch
      %160 = sbr.rel (%p157) target = $region12
    $region11: #{interpolate_conv_upsample.1} parent=5 // pred_region
      %s161 = ssub.s32 %s11, 1
      // Predicated region
      $region13: #{interpolate_conv_upsample.1} parent=11 // pred_check
        %p162 = pneg %p58
      $region14: #{interpolate_conv_upsample.1} parent=11 // pred_check_branch
        %164 = sbr.rel (%p162) target = $region16
      $region15: #{interpolate_conv_upsample.1} parent=11 // pred_region
        _
      $region16: #{interpolate_conv_upsample.1} parent=11 // pred_fallthru
        _
      // Predicated region
      $region17: #{interpolate_conv_upsample.1} parent=11 // pred_check
        %p165 = pneg %p79
      $region18: #{interpolate_conv_upsample.1} parent=11 // pred_check_branch
        %167 = sbr.rel (%p165) target = $region20
      $region19: #{interpolate_conv_upsample.1} parent=11 // pred_region
        _
      $region20: #{interpolate_conv_upsample.1} parent=11 // pred_fallthru
        _
      // Predicated region
      $region21: #{interpolate_conv_upsample.1} parent=11 // pred_check
        %p168 = pneg %p100
      $region22: #{interpolate_conv_upsample.1} parent=11 // pred_check_branch
        %170 = sbr.rel (%p168) target = $region24
      $region23: #{interpolate_conv_upsample.1} parent=11 // pred_region
        _
      $region24: #{interpolate_conv_upsample.1} parent=11 // pred_fallthru
        _
      // Predicated region
      $region25: #{interpolate_conv_upsample.1} parent=11 // pred_check
        %p171 = pneg %p121
      $region26: #{interpolate_conv_upsample.1} parent=11 // pred_check_branch
        %173 = sbr.rel (%p171) target = $region28
      $region27: #{interpolate_conv_upsample.1} parent=11 // pred_region
        _
      $region28: #{interpolate_conv_upsample.1} parent=11 // pred_fallthru
        _
    $region12: #{interpolate_conv_upsample.1} parent=5 // pred_fallthru
      _
    %p174 = scmp.lt.s32.totalorder %s11, 2
    // Predicated region
    $region29: #{interpolate_conv_upsample.1} parent=5 // pred_check
      %p175 = pneg %p174
    $region30: #{interpolate_conv_upsample.1} parent=5 // pred_check_branch
      %177 = sbr.rel (%p175) target = $region32
    $region31: #{interpolate_conv_upsample.1} parent=5 // pred_region
      // Predicated region
      $region33: #{interpolate_conv_upsample.1} parent=31 // pred_check
        %p178 = pneg %p31
      $region34: #{interpolate_conv_upsample.1} parent=31 // pred_check_branch
        %180 = sbr.rel (%p178) target = $region36
      $region35: #{interpolate_conv_upsample.1} parent=31 // pred_region
        %p181 = scmp.lt.s32.totalorder %s11, 1
        %s182 = scalar_select %p181, %s11, 1
        %s183 = smul.addr %s182, 8
        %s184 = smul.addr %s183, 8
        %s185 = scalar_lea.vmem %s0, %s184
      $region36: #{interpolate_conv_upsample.1} parent=31 // pred_fallthru
        _
    $region32: #{interpolate_conv_upsample.1} parent=5 // pred_fallthru
      _
    %p186 = scmp.le.s32.totalorder 1, %s11
    %p187 = scmp.lt.s32.totalorder %s11, 3
    %p188 = pnand %p186, %p187
    %p189 = pneg %p188
    // Predicated region
    $region37: #{interpolate_conv_upsample.1} parent=5 // pred_check
      _
    $region38: #{interpolate_conv_upsample.1} parent=5 // pred_check_branch
      %191 = sbr.rel (%p188) target = $region40
    $region39: #{interpolate_conv_upsample.1} parent=5 // pred_region
      %s192 = ssub.s32 %s11, 1
      %p193 = scmp.lt.s32.totalorder %s16, 1
      %s194 = scalar_select %p193, %s16, 1
      %s195 = smul.addr %s194, 8
      %s196 = smul.addr %s195, 8
      %s197 = scalar_lea.vmem %s0, %s196
      %p198 = pneg %p37
      %p199 = pneg %p34
      %p200 = pneg %p58
      %p201 = pneg %p55
      %p202 = pneg %p79
      %p203 = pneg %p76
      %p204 = pneg %p100
      %p205 = pneg %p97
      %p206 = pneg %p121
      %p207 = pneg %p118
      %p208 = pneg %p147
      %p209 = pneg %p144
      %p210 = scmp.lt.s32.totalorder %s16, 1
      %s211 = scalar_select %p210, %s16, 1
      %s212 = smul.addr %s211, 8
      %s213 = smul.addr %s212, 8
      %s214 = scalar_lea.vmem %s5, %s213
      %p215 = scmp.lt.s32.totalorder %s16, 1
      %s216 = scalar_select %p215, %s16, 1
      %s217 = smul.addr %s216, 8
      %s218 = smul.addr %s217, 8
      %s219 = scalar_lea.vmem %s0, %s218
      %p220 = scmp.lt.s32.totalorder %s16, 1
      %s221 = scalar_select %p220, %s16, 1
      %s222 = smul.addr %s221, 8
      %s223 = smul.addr %s222, 8
      %s224 = scalar_lea.vmem %s5, %s223
      %225 = vst [vmem:[#allocation2] sm:$0xff] 0.0
      %226 = vst [vmem:[#allocation2 + $0x8] sm:$0xff] 0.0
      %227 = vst [vmem:[#allocation2 + $0x10] sm:$0xff] 0.0
      %228 = vst [vmem:[#allocation2 + $0x18] sm:$0xff] 0.0
      %vm229 = vcmask 535552
      %230 = vst.msk [vmem:[#allocation2 + $0x20] sm:$0xf] %vm229, 0.0
      %v231 = vld [vmem:[%s219] sm:$0xff]
      %v232 = vld [vmem:[%s219 + $0x8] sm:$0xff]
      %v233 = vld [vmem:[%s219 + $0x10] sm:$0xff]
      %v234 = vld [vmem:[%s219 + $0x18] sm:$0xff]
      %v235 = vld [vmem:[%s219 + $0x20] sm:$0xff]
      %v236 = vld [vmem:[%s219 + $0x28] sm:$0xff]
      %v237 = vld [vmem:[%s219 + $0x30] sm:$0xff]
      %v238 = vld [vmem:[%s219 + $0x38] sm:$0xff]
      %v239 = vld [vmem:[%s1] sm:$0xff]
      %v240 = vld [vmem:[%s1 + $0x8] sm:$0xff]
      %vm241 = vcmask 130048
      %v243 = vsel %vm241, %v231, 0
      %v246 = vsel %vm241, %v232, 0
      %v249 = vsel %vm241, %v233, 0
      %v252 = vsel %vm241, %v234, 0
      %v255 = vsel %vm241, %v235, 0
      %v258 = vsel %vm241, %v236, 0
      %v261 = vsel %vm241, %v237, 0
      %v264 = vsel %vm241, %v238, 0
      %266 = vmatprep.subr.mxu0 0.0
      %267 = vmatpush1.msra.mxu0 %v239
      %268 = vmatprep.subr.mxu0 0.0
      %269 = vmatpush1.msra.mxu0 %v240
      %270 = vmatprep.subr.mxu0 0.0
      %271 = vmatpush1.msra.mxu0 0.0
      %272 = vmatprep.subr.mxu0 0.0
      %273 = vmatpush1.msra.mxu0 0.0
      %274 = vmatprep.subr.mxu0 0.0
      %275 = vmatpush1.msra.mxu0 0.0
      %276 = vmatprep.subr.mxu0 0.0
      %277 = vmatpush1.msra.mxu0 0.0
      %278 = vmatprep.subr.mxu0 0.0
      %279 = vmatpush1.msra.mxu0 0.0
      %280 = vmatprep.subr.mxu0 0.0
      %281 = vmatpush1.msra.mxu0 0.0
      %282 = vmatprep.subr.mxu0 0.0
      %283 = vmatpush1.msra.mxu0 0.0
      %284 = vmatprep.subr.mxu0 0.0
      %285 = vmatpush1.msra.mxu0 0.0
      %286 = vmatprep.subr.mxu0 0.0
      %287 = vmatpush1.msra.mxu0 0.0
      %288 = vmatprep.subr.mxu0 0.0
      %289 = vmatpush1.msra.mxu0 0.0
      %290 = vmatprep.subr.mxu0 0.0
      %291 = vmatpush1.msra.mxu0 0.0
      %292 = vmatprep.subr.mxu0 0.0
      %293 = vmatpush1.msra.mxu0 0.0
      %294 = vmatprep.subr.mxu0 0.0
      %295 = vmatpush1.msra.mxu0 0.0
      %296 = vmatprep.subr.mxu0 0.0
      %297 = vmatpush1.msra.mxu0 0.0
      %298 = vmatprep.subr.mxu0 0.0
      %299 = vmatpush1.msra.mxu0 0.0
      %300 = vmatprep.subr.mxu0 0.0
      %301 = vmatpush1.msra.mxu0 0.0
      %302 = vmatprep.subr.mxu0 0.0
      %303 = vmatpush1.msra.mxu0 0.0
      %304 = vmatprep.subr.mxu0 0.0
      %305 = vmatpush1.msra.mxu0 0.0
      %306 = vmatprep.subr.mxu0 0.0
      %307 = vmatpush1.msra.mxu0 0.0
      %308 = vmatprep.subr.mxu0 0.0
      %309 = vmatpush1.msra.mxu0 0.0
      %310 = vmatprep.subr.mxu0 0.0
      %311 = vmatpush1.msra.mxu0 0.0
      %312 = vmatprep.subr.mxu0 0.0
      %313 = vmatpush1.msra.mxu0 0.0
      %314 = vmatprep.subr.mxu0 0.0
      %315 = vmatpush1.msra.mxu0 0.0
      %316 = vmatprep.subr.mxu0 0.0
      %317 = vmatpush1.msra.mxu0 0.0
      %318 = vmatprep.subr.mxu0 0.0
      %319 = vmatpush1.msra.mxu0 0.0
      %320 = vmatprep.subr.mxu0 0.0
      %321 = vmatpush1.msra.mxu0 0.0
      %322 = vmatprep.subr.mxu0 0.0
      %323 = vmatpush1.msra.mxu0 0.0
      %324 = vmatprep.subr.mxu0 0.0
      %325 = vmatpush1.msra.mxu0 0.0
      %326 = vmatprep.subr.mxu0 0.0
      %327 = vmatpush1.msra.mxu0 0.0
      %328 = vmatprep.subr.mxu0 0.0
      %329 = vmatpush1.msra.mxu0 0.0
      %330 = vmatprep.mubr.f32.mxu0 0.0
      %331 = vmatmul.mubr.f32.gmra.mrb[0].mxu0 %v243
      %v332 = vpop.f32.mrb[0].mxu0
      %v333 = vadd.f32 0.0, %v332
      %v334 = vpop.f32.mrb[0].mxu0
      %335 = vmatprep.mubr.f32.mxu0 0.0
      %336 = vmatmul.mubr.f32.gmra.mrb[0].mxu0 %v246
      %v337 = vpop.f32.mrb[0].mxu0
      %v338 = vadd.f32 0.0, %v337
      %v339 = vpop.f32.mrb[0].mxu0
      %340 = vmatprep.mubr.f32.mxu0 0.0
      %341 = vmatmul.mubr.f32.gmra.mrb[0].mxu0 %v249
      %v342 = vpop.f32.mrb[0].mxu0
      %v343 = vadd.f32 0.0, %v342
      %v344 = vpop.f32.mrb[0].mxu0
      %345 = vmatprep.mubr.f32.mxu0 0.0
      %346 = vmatmul.mubr.f32.gmra.mrb[0].mxu0 %v252
      %v347 = vpop.f32.mrb[0].mxu0
      %v348 = vadd.f32 0.0, %v347
      %v349 = vpop.f32.mrb[0].mxu0
      %350 = vmatprep.mubr.f32.mxu0 0.0
      %351 = vmatmul.mubr.f32.gmra.mrb[0].mxu0 %v255
      %v352 = vpop.f32.mrb[0].mxu0
      %v353 = vadd.f32 0.0, %v352
      %v354 = vpop.f32.mrb[0].mxu0
      %355 = vmatprep.mubr.f32.mxu0 0.0
      %356 = vmatmul.mubr.f32.gmra.mrb[0].mxu0 %v258
      %v357 = vpop.f32.mrb[0].mxu0
      %v358 = vadd.f32 0.0, %v357
      %v359 = vpop.f32.mrb[0].mxu0
      %360 = vmatprep.mubr.f32.mxu0 0.0
      %361 = vmatmul.mubr.f32.gmra.mrb[0].mxu0 %v261
      %v362 = vpop.f32.mrb[0].mxu0
      %v363 = vadd.f32 0.0, %v362
      %v364 = vpop.f32.mrb[0].mxu0
      %365 = vmatprep.mubr.f32.mxu0 0.0
      %366 = vmatmul.mubr.f32.gmra.mrb[0].mxu0 %v264
      %v367 = vpop.f32.mrb[0].mxu0
      %v368 = vadd.f32 0.0, %v367
      %v369 = vpop.f32.mrb[0].mxu0
      %370 = vdwg.mxu0
      %v375 = vrot.slane %v343, 7
      %vm376 = vcmask 1041409
      %v377 = vsel %vm376, %v375, %v333
      %vm378 = vcmask 1045509
      %v379 = vsel %vm378, %v375, %v377
      %v380 = vrot.slane %v353, 6
      %vm381 = vcmask 1042434
      %v382 = vsel %vm381, %v380, %v379
      %vm383 = vcmask 1046534
      %v384 = vsel %vm383, %v380, %v382
      %v385 = vrot.slane %v363, 5
      %vm386 = vcmask 1043459
      %v387 = vsel %vm386, %v385, %v384
      %vm388 = vcmask 1047559
      %v389 = vsel %vm388, %v385, %v387
      %390 = vrot.lane.b32.xlu0 %v389, 33
      %v391 = vpop.permute.xlu0 %390
      %vm393 = vcmask 527624
      %394 = vst.msk [vmem:[#allocation2] sm:$0xf] %vm393, %v391
      %395 = vrot.lane.b32.xlu0 %v389, 65
      %v396 = vpop.permute.xlu0 %395
      %vm398 = vcmask 790024
      %399 = vst.msk [vmem:[#allocation2] sm:$0xf] %vm398, %v396
      %v400 = vrot.slane %v333, 1
      %v401 = vsel %vm376, %v343, %v400
      %v402 = vsel %vm378, %v343, %v401
      %v403 = vrot.slane %v353, 7
      %v404 = vsel %vm381, %v403, %v402
      %v405 = vsel %vm383, %v403, %v404
      %v406 = vrot.slane %v363, 6
      %v407 = vsel %vm386, %v406, %v405
      %v408 = vsel %vm388, %v406, %v407
      %409 = vrot.lane.b32.xlu0 %v408, 97
      %v410 = vpop.permute.xlu0 %409
      %v411 = vrot.slane %v410, 4
      %vm412 = vcmask 793600
      %v413 = vsel %vm412, %v411, %v410
      %vm415 = vcmask 1044232
      %vm416 = vcmask 7172
      %vm417 = vmor %vm416, %vm415
      %418 = vst.msk [vmem:[#allocation2] sm:$0xff] %vm417, %v413
      %419 = vrot.lane.b32.xlu0 %v408, 1
      %v420 = vpop.permute.xlu0 %419
      %vm422 = vcmask 265224
      %423 = vst.msk [vmem:[#allocation2 + $0x4] sm:$0xf] %vm422, %v420
      %v424 = vrot.slane %v333, 2
      %v425 = vrot.slane %v343, 1
      %v426 = vsel %vm376, %v425, %v424
      %v427 = vsel %vm378, %v425, %v426
      %v428 = vsel %vm381, %v353, %v427
      %v429 = vsel %vm383, %v353, %v428
      %v430 = vrot.slane %v363, 7
      %v431 = vsel %vm386, %v430, %v429
      %v432 = vsel %vm388, %v430, %v431
      %433 = vrot.lane.b32.xlu0 %v432, 33
      %v434 = vpop.permute.xlu0 %433
      %436 = vst.msk [vmem:[#allocation2 + $0x4] sm:$0xf] %vm393, %v434
      %437 = vrot.lane.b32.xlu0 %v432, 65
      %v438 = vpop.permute.xlu0 %437
      %440 = vst.msk [vmem:[#allocation2 + $0x4] sm:$0xf] %vm398, %v438
      %v441 = vrot.slane %v333, 3
      %v442 = vrot.slane %v343, 2
      %v443 = vsel %vm376, %v442, %v441
      %v444 = vsel %vm378, %v442, %v443
      %v445 = vrot.slane %v353, 1
      %v446 = vsel %vm381, %v445, %v444
      %v447 = vsel %vm383, %v445, %v446
      %v448 = vsel %vm386, %v363, %v447
      %v449 = vsel %vm388, %v363, %v448
      %450 = vrot.lane.b32.xlu0 %v449, 97
      %v451 = vpop.permute.xlu0 %450
      %v452 = vrot.slane %v451, 4
      %v453 = vsel %vm412, %v452, %v451
      %455 = vst.msk [vmem:[#allocation2 + $0x4] sm:$0xff] %vm417, %v453
      %456 = vrot.lane.b32.xlu0 %v449, 1
      %v457 = vpop.permute.xlu0 %456
      %459 = vst.msk [vmem:[#allocation2 + $0x8] sm:$0xf] %vm422, %v457
      %v460 = vcombine.high %v333, %v333
      %v461 = vcombine.high %v343, %v343
      %v462 = vcombine.high %v353, %v353
      %v463 = vcombine.high %v363, %v363
      %v464 = vrot.slane %v461, 7
      %v465 = vsel %vm376, %v464, %v460
      %v466 = vsel %vm378, %v464, %v465
      %v467 = vrot.slane %v462, 6
      %v468 = vsel %vm381, %v467, %v466
      %v469 = vsel %vm383, %v467, %v468
      %v470 = vrot.slane %v463, 5
      %v471 = vsel %vm386, %v470, %v469
      %v472 = vsel %vm388, %v470, %v471
      %473 = vrot.lane.b32.xlu0 %v472, 33
      %v474 = vpop.permute.xlu0 %473
      %476 = vst.msk [vmem:[#allocation2 + $0x8] sm:$0xf] %vm393, %v474
      %477 = vrot.lane.b32.xlu0 %v472, 65
      %v478 = vpop.permute.xlu0 %477
      %480 = vst.msk [vmem:[#allocation2 + $0x8] sm:$0xf] %vm398, %v478
      %v481 = vrot.slane %v460, 1
      %v482 = vsel %vm376, %v461, %v481
      %v483 = vsel %vm378, %v461, %v482
      %v484 = vrot.slane %v462, 7
      %v485 = vsel %vm381, %v484, %v483
      %v486 = vsel %vm383, %v484, %v485
      %v487 = vrot.slane %v463, 6
      %v488 = vsel %vm386, %v487, %v486
      %v489 = vsel %vm388, %v487, %v488
      %490 = vrot.lane.b32.xlu0 %v489, 97
      %v491 = vpop.permute.xlu0 %490
      %v492 = vrot.slane %v491, 4
      %v493 = vsel %vm412, %v492, %v491
      %495 = vst.msk [vmem:[#allocation2 + $0x8] sm:$0xff] %vm417, %v493
      %496 = vrot.lane.b32.xlu0 %v489, 1
      %v497 = vpop.permute.xlu0 %496
      %499 = vst.msk [vmem:[#allocation2 + $0xc] sm:$0xf] %vm422, %v497
      %v500 = vrot.slane %v460, 2
      %v501 = vrot.slane %v461, 1
      %v502 = vsel %vm376, %v501, %v500
      %v503 = vsel %vm378, %v501, %v502
      %v504 = vsel %vm381, %v462, %v503
      %v505 = vsel %vm383, %v462, %v504
      %v506 = vrot.slane %v463, 7
      %v507 = vsel %vm386, %v506, %v505
      %v508 = vsel %vm388, %v506, %v507
      %509 = vrot.lane.b32.xlu0 %v508, 33
      %v510 = vpop.permute.xlu0 %509
      %512 = vst.msk [vmem:[#allocation2 + $0xc] sm:$0xf] %vm393, %v510
      %513 = vrot.lane.b32.xlu0 %v508, 65
      %v514 = vpop.permute.xlu0 %513
      %516 = vst.msk [vmem:[#allocation2 + $0xc] sm:$0xf] %vm398, %v514
      %v517 = vrot.slane %v460, 3
      %v518 = vrot.slane %v461, 2
      %v519 = vsel %vm376, %v518, %v517
      %v520 = vsel %vm378, %v518, %v519
      %v521 = vrot.slane %v462, 1
      %v522 = vsel %vm381, %v521, %v520
      %v523 = vsel %vm383, %v521, %v522
      %v524 = vsel %vm386, %v463, %v523
      %v525 = vsel %vm388, %v463, %v524
      %526 = vrot.lane.b32.xlu0 %v525, 97
      %v527 = vpop.permute.xlu0 %526
      %v528 = vrot.slane %v527, 4
      %v529 = vsel %vm412, %v528, %v527
      %531 = vst.msk [vmem:[#allocation2 + $0xc] sm:$0xff] %vm417, %v529
      %532 = vrot.lane.b32.xlu0 %v525, 1
      %v533 = vpop.permute.xlu0 %532
      %535 = vst.msk [vmem:[#allocation2 + $0x10] sm:$0xf] %vm422, %v533
      %v540 = vrot.slane %v348, 7
      %v541 = vsel %vm376, %v540, %v338
      %v542 = vsel %vm378, %v540, %v541
      %v543 = vrot.slane %v358, 6
      %v544 = vsel %vm381, %v543, %v542
      %v545 = vsel %vm383, %v543, %v544
      %v546 = vrot.slane %v368, 5
      %v547 = vsel %vm386, %v546, %v545
      %v548 = vsel %vm388, %v546, %v547
      %549 = vrot.lane.b32.xlu0 %v548, 33
      %v550 = vpop.permute.xlu0 %549
      %552 = vst.msk [vmem:[#allocation2 + $0x10] sm:$0xf] %vm393, %v550
      %553 = vrot.lane.b32.xlu0 %v548, 65
      %v554 = vpop.permute.xlu0 %553
      %556 = vst.msk [vmem:[#allocation2 + $0x10] sm:$0xf] %vm398, %v554
      %v557 = vrot.slane %v338, 1
      %v558 = vsel %vm376, %v348, %v557
      %v559 = vsel %vm378, %v348, %v558
      %v560 = vrot.slane %v358, 7
      %v561 = vsel %vm381, %v560, %v559
      %v562 = vsel %vm383, %v560, %v561
      %v563 = vrot.slane %v368, 6
      %v564 = vsel %vm386, %v563, %v562
      %v565 = vsel %vm388, %v563, %v564
      %566 = vrot.lane.b32.xlu0 %v565, 97
      %v567 = vpop.permute.xlu0 %566
      %v568 = vrot.slane %v567, 4
      %v569 = vsel %vm412, %v568, %v567
      %571 = vst.msk [vmem:[#allocation2 + $0x10] sm:$0xff] %vm417, %v569
      %572 = vrot.lane.b32.xlu0 %v565, 1
      %v573 = vpop.permute.xlu0 %572
      %575 = vst.msk [vmem:[#allocation2 + $0x14] sm:$0xf] %vm422, %v573
      %v576 = vrot.slane %v338, 2
      %v577 = vrot.slane %v348, 1
      %v578 = vsel %vm376, %v577, %v576
      %v579 = vsel %vm378, %v577, %v578
      %v580 = vsel %vm381, %v358, %v579
      %v581 = vsel %vm383, %v358, %v580
      %v582 = vrot.slane %v368, 7
      %v583 = vsel %vm386, %v582, %v581
      %v584 = vsel %vm388, %v582, %v583
      %585 = vrot.lane.b32.xlu0 %v584, 33
      %v586 = vpop.permute.xlu0 %585
      %588 = vst.msk [vmem:[#allocation2 + $0x14] sm:$0xf] %vm393, %v586
      %589 = vrot.lane.b32.xlu0 %v584, 65
      %v590 = vpop.permute.xlu0 %589
      %592 = vst.msk [vmem:[#allocation2 + $0x14] sm:$0xf] %vm398, %v590
      %v593 = vrot.slane %v338, 3
      %v594 = vrot.slane %v348, 2
      %v595 = vsel %vm376, %v594, %v593
      %v596 = vsel %vm378, %v594, %v595
      %v597 = vrot.slane %v358, 1
      %v598 = vsel %vm381, %v597, %v596
      %v599 = vsel %vm383, %v597, %v598
      %v600 = vsel %vm386, %v368, %v599
      %v601 = vsel %vm388, %v368, %v600
      %602 = vrot.lane.b32.xlu0 %v601, 97
      %v603 = vpop.permute.xlu0 %602
      %v604 = vrot.slane %v603, 4
      %v605 = vsel %vm412, %v604, %v603
      %607 = vst.msk [vmem:[#allocation2 + $0x14] sm:$0xff] %vm417, %v605
      %608 = vrot.lane.b32.xlu0 %v601, 1
      %v609 = vpop.permute.xlu0 %608
      %611 = vst.msk [vmem:[#allocation2 + $0x18] sm:$0xf] %vm422, %v609
      %v612 = vcombine.high %v338, %v338
      %v613 = vcombine.high %v348, %v348
      %v614 = vcombine.high %v358, %v358
      %v615 = vcombine.high %v368, %v368
      %v616 = vrot.slane %v613, 7
      %v617 = vsel %vm376, %v616, %v612
      %v618 = vsel %vm378, %v616, %v617
      %v619 = vrot.slane %v614, 6
      %v620 = vsel %vm381, %v619, %v618
      %v621 = vsel %vm383, %v619, %v620
      %v622 = vrot.slane %v615, 5
      %v623 = vsel %vm386, %v622, %v621
      %v624 = vsel %vm388, %v622, %v623
      %625 = vrot.lane.b32.xlu0 %v624, 33
      %v626 = vpop.permute.xlu0 %625
      %628 = vst.msk [vmem:[#allocation2 + $0x18] sm:$0xf] %vm393, %v626
      %629 = vrot.lane.b32.xlu0 %v624, 65
      %v630 = vpop.permute.xlu0 %629
      %632 = vst.msk [vmem:[#allocation2 + $0x18] sm:$0xf] %vm398, %v630
      %v633 = vrot.slane %v612, 1
      %v634 = vsel %vm376, %v613, %v633
      %v635 = vsel %vm378, %v613, %v634
      %v636 = vrot.slane %v614, 7
      %v637 = vsel %vm381, %v636, %v635
      %v638 = vsel %vm383, %v636, %v637
      %v639 = vrot.slane %v615, 6
      %v640 = vsel %vm386, %v639, %v638
      %v641 = vsel %vm388, %v639, %v640
      %642 = vrot.lane.b32.xlu0 %v641, 97
      %v643 = vpop.permute.xlu0 %642
      %v644 = vrot.slane %v643, 4
      %v645 = vsel %vm412, %v644, %v643
      %647 = vst.msk [vmem:[#allocation2 + $0x18] sm:$0xff] %vm417, %v645
      %648 = vrot.lane.b32.xlu0 %v641, 1
      %v649 = vpop.permute.xlu0 %648
      %651 = vst.msk [vmem:[#allocation2 + $0x1c] sm:$0xf] %vm422, %v649
      %v652 = vrot.slane %v612, 2
      %v653 = vrot.slane %v613, 1
      %v654 = vsel %vm376, %v653, %v652
      %v655 = vsel %vm378, %v653, %v654
      %v656 = vsel %vm381, %v614, %v655
      %v657 = vsel %vm383, %v614, %v656
      %v658 = vrot.slane %v615, 7
      %v659 = vsel %vm386, %v658, %v657
      %v660 = vsel %vm388, %v658, %v659
      %661 = vrot.lane.b32.xlu0 %v660, 33
      %v662 = vpop.permute.xlu0 %661
      %664 = vst.msk [vmem:[#allocation2 + $0x1c] sm:$0xf] %vm393, %v662
      %665 = vrot.lane.b32.xlu0 %v660, 65
      %v666 = vpop.permute.xlu0 %665
      %668 = vst.msk [vmem:[#allocation2 + $0x1c] sm:$0xf] %vm398, %v666
      %v669 = vrot.slane %v612, 3
      %v670 = vrot.slane %v613, 2
      %v671 = vsel %vm376, %v670, %v669
      %v672 = vsel %vm378, %v670, %v671
      %v673 = vrot.slane %v614, 1
      %v674 = vsel %vm381, %v673, %v672
      %v675 = vsel %vm383, %v673, %v674
      %v676 = vsel %vm386, %v615, %v675
      %v677 = vsel %vm388, %v615, %v676
      %678 = vrot.lane.b32.xlu0 %v677, 97
      %v679 = vpop.permute.xlu0 %678
      %v680 = vrot.slane %v679, 4
      %v681 = vsel %vm412, %v680, %v679
      %683 = vst.msk [vmem:[#allocation2 + $0x1c] sm:$0xff] %vm417, %v681
      %684 = vrot.lane.b32.xlu0 %v677, 1
      %v685 = vpop.permute.xlu0 %684
      %687 = vst.msk [vmem:[#allocation2 + $0x20] sm:$0xf] %vm422, %v685
      %v688 = vld [vmem:[#allocation2] sm:$0xff]
      %v689 = vld [vmem:[#allocation2 + $0x8] sm:$0xff]
      %v690 = vld [vmem:[#allocation2 + $0x10] sm:$0xff]
      %v691 = vld [vmem:[#allocation2 + $0x18] sm:$0xff]
      %v692 = vld [vmem:[%s3] sm:$0xff]
      %v694 = vlaneseq
      %v695 = vshrl.u32 %v694, 7
      %v696 = vsub.s32 0, %v695
      %v697 = vrot.slane %v692, %v696
      %v698 = vlaneseq
      %v699 = vshrl.u32 %v698, 7
      %v700 = vsub.s32 1, %v699
      %v701 = vrot.slane %v692, %v700
      %v702 = vlaneseq
      %v703 = vshrl.u32 %v702, 7
      %v704 = vsub.s32 2, %v703
      %v705 = vrot.slane %v692, %v704
      %v706 = vlaneseq
      %v707 = vshrl.u32 %v706, 7
      %v708 = vsub.s32 3, %v707
      %v709 = vrot.slane %v692, %v708
      %v710 = vlaneseq
      %v711 = vshrl.u32 %v710, 7
      %v712 = vsub.s32 4, %v711
      %v713 = vrot.slane %v692, %v712
      %v714 = vlaneseq
      %v715 = vshrl.u32 %v714, 7
      %v716 = vsub.s32 5, %v715
      %v717 = vrot.slane %v692, %v716
      %v718 = vlaneseq
      %v719 = vshrl.u32 %v718, 7
      %v720 = vsub.s32 6, %v719
      %v721 = vrot.slane %v692, %v720
      %v722 = vlaneseq
      %v723 = vshrl.u32 %v722, 7
      %v724 = vsub.s32 7, %v723
      %v725 = vrot.slane %v692, %v724
      %v726 = vcombine.low %v697, %v701
      %v727 = vcombine.low %v705, %v709
      %v728 = vcombine.low %v713, %v717
      %v729 = vcombine.low %v721, %v725
      %v734 = vmul.f32 %v688, %v726
      %v735 = vmul.f32 %v689, %v727
      %v736 = vmul.f32 %v690, %v728
      %v737 = vmul.f32 %v691, %v729
      %v742 = vcombine.high %v734, %v734
      %v743 = vcombine.high %v735, %v735
      %v744 = vcombine.high %v736, %v736
      %v745 = vcombine.high %v737, %v737
      %750 = vst [vmem:[#allocation3] sm:$0xf] %v734
      %751 = vst [vmem:[#allocation3 + $0x8] sm:$0xf] %v742
      %752 = vst [vmem:[#allocation3 + $0x10] sm:$0xf] %v735
      %753 = vst [vmem:[#allocation3 + $0x18] sm:$0xf] %v743
      %754 = vst [vmem:[#allocation3 + $0x20] sm:$0xf] %v736
      %755 = vst [vmem:[#allocation3 + $0x28] sm:$0xf] %v744
      %756 = vst [vmem:[#allocation3 + $0x30] sm:$0xf] %v737
      %757 = vst [vmem:[#allocation3 + $0x38] sm:$0xf] %v745
      %v758 = vld [vmem:[#allocation2] sm:$0xff]
      %v759 = vld [vmem:[#allocation2 + $0x8] sm:$0xff]
      %v760 = vld [vmem:[#allocation2 + $0x10] sm:$0xff]
      %v761 = vld [vmem:[#allocation2 + $0x18] sm:$0xff]
      %v762 = vld [vmem:[#allocation2 + $0x20] sm:$0xf]
      %s763 = scalar_lea.vmem %s3, 8
      %v764 = vld [vmem:[%s763] sm:$0xff]
      %v766 = vlaneseq
      %v767 = vshrl.u32 %v766, 7
      %v768 = vsub.s32 0, %v767
      %v769 = vrot.slane %v764, %v768
      %v770 = vlaneseq
      %v771 = vshrl.u32 %v770, 7
      %v772 = vsub.s32 1, %v771
      %v773 = vrot.slane %v764, %v772
      %v774 = vlaneseq
      %v775 = vshrl.u32 %v774, 7
      %v776 = vsub.s32 2, %v775
      %v777 = vrot.slane %v764, %v776
      %v778 = vlaneseq
      %v779 = vshrl.u32 %v778, 7
      %v780 = vsub.s32 3, %v779
      %v781 = vrot.slane %v764, %v780
      %v782 = vlaneseq
      %v783 = vshrl.u32 %v782, 7
      %v784 = vsub.s32 4, %v783
      %v785 = vrot.slane %v764, %v784
      %v786 = vlaneseq
      %v787 = vshrl.u32 %v786, 7
      %v788 = vsub.s32 5, %v787
      %v789 = vrot.slane %v764, %v788
      %v790 = vlaneseq
      %v791 = vshrl.u32 %v790, 7
      %v792 = vsub.s32 6, %v791
      %v793 = vrot.slane %v764, %v792
      %v794 = vlaneseq
      %v795 = vshrl.u32 %v794, 7
      %v796 = vsub.s32 7, %v795
      %v797 = vrot.slane %v764, %v796
      %v798 = vcombine.low %v769, %v773
      %v799 = vcombine.low %v777, %v781
      %v800 = vcombine.low %v785, %v789
      %v801 = vcombine.low %v793, %v797
      %802 = vrot.lane.b32.xlu0 %v798, 1
      %v803 = vpop.permute.xlu0 %802
      %804 = vrot.lane.b32.xlu0 %v799, 1
      %v805 = vpop.permute.xlu0 %804
      %806 = vrot.lane.b32.xlu0 %v800, 1
      %v807 = vpop.permute.xlu0 %806
      %808 = vrot.lane.b32.xlu0 %v801, 1
      %v809 = vpop.permute.xlu0 %808
      %v810 = vrot.slane %v803, 4
      %v811 = vrot.slane %v805, 4
      %v812 = vrot.slane %v807, 4
      %v813 = vrot.slane %v809, 4
      %vm814 = vcmask 7168
      %v815 = vsel %vm814, %v810, %v803
      %vm816 = vcmask 1043456
      %v817 = vsel %vm816, %v810, %v811
      %v818 = vsel %vm814, %v817, %v805
      %v819 = vsel %vm816, %v811, %v812
      %v820 = vsel %vm814, %v819, %v807
      %v821 = vsel %vm816, %v812, %v813
      %v822 = vsel %vm814, %v821, %v809
      %v828 = vmul.f32 %v758, %v815
      %v829 = vmul.f32 %v759, %v818
      %v830 = vmul.f32 %v760, %v820
      %v831 = vmul.f32 %v761, %v822
      %v832 = vmul.f32 %v762, %v813
      %v838 = vcombine.low %v828, %v828
      %v839 = vcombine.low %v829, %v829
      %v840 = vcombine.low %v830, %v830
      %v841 = vcombine.low %v831, %v831
      %v842 = vcombine.low %v832, %v832
      %843 = vrot.lane.b32.xlu0 %v838, 127
      %v844 = vpop.permute.xlu0 %843
      %845 = vrot.lane.b32.xlu0 %v828, 127
      %v846 = vpop.permute.xlu0 %845
      %847 = vrot.lane.b32.xlu0 %v839, 127
      %v848 = vpop.permute.xlu0 %847
      %849 = vrot.lane.b32.xlu0 %v829, 127
      %v850 = vpop.permute.xlu0 %849
      %851 = vrot.lane.b32.xlu0 %v840, 127
      %v852 = vpop.permute.xlu0 %851
      %853 = vrot.lane.b32.xlu0 %v830, 127
      %v854 = vpop.permute.xlu0 %853
      %855 = vrot.lane.b32.xlu0 %v841, 127
      %v856 = vpop.permute.xlu0 %855
      %857 = vrot.lane.b32.xlu0 %v831, 127
      %v858 = vpop.permute.xlu0 %857
      %859 = vrot.lane.b32.xlu0 %v842, 127
      %v860 = vpop.permute.xlu0 %859
      %vm861 = vcmask 1039360
      %v862 = vsel %vm861, %v844, %v846
      %v863 = vsel %vm861, %v846, %v848
      %v864 = vsel %vm861, %v848, %v850
      %v865 = vsel %vm861, %v850, %v852
      %v866 = vsel %vm861, %v852, %v854
      %v867 = vsel %vm861, %v854, %v856
      %v868 = vsel %vm861, %v856, %v858
      %v869 = vsel %vm861, %v858, %v860
      %878 = vst [vmem:[#allocation3] sm:$0xf0] %v862
      %879 = vst [vmem:[#allocation3 + $0x8] sm:$0xf0] %v863
      %880 = vst [vmem:[#allocation3 + $0x10] sm:$0xf0] %v864
      %881 = vst [vmem:[#allocation3 + $0x18] sm:$0xf0] %v865
      %882 = vst [vmem:[#allocation3 + $0x20] sm:$0xf0] %v866
      %883 = vst [vmem:[#allocation3 + $0x28] sm:$0xf0] %v867
      %884 = vst [vmem:[#allocation3 + $0x30] sm:$0xf0] %v868
      %885 = vst [vmem:[#allocation3 + $0x38] sm:$0xf0] %v869
      %v886 = vld [vmem:[#allocation2] sm:$0xff]
      %v887 = vld [vmem:[#allocation2 + $0x8] sm:$0xff]
      %v888 = vld [vmem:[#allocation2 + $0x10] sm:$0xff]
      %v889 = vld [vmem:[#allocation2 + $0x18] sm:$0xff]
      %v890 = vld [vmem:[#allocation2 + $0x20] sm:$0xf]
      %s891 = scalar_lea.vmem %s3, 16
      %v892 = vld [vmem:[%s891] sm:$0xff]
      %v894 = vlaneseq
      %v895 = vshrl.u32 %v894, 7
      %v896 = vsub.s32 0, %v895
      %v897 = vrot.slane %v892, %v896
      %v898 = vlaneseq
      %v899 = vshrl.u32 %v898, 7
      %v900 = vsub.s32 1, %v899
      %v901 = vrot.slane %v892, %v900
      %v902 = vlaneseq
      %v903 = vshrl.u32 %v902, 7
      %v904 = vsub.s32 2, %v903
      %v905 = vrot.slane %v892, %v904
      %v906 = vlaneseq
      %v907 = vshrl.u32 %v906, 7
      %v908 = vsub.s32 3, %v907
      %v909 = vrot.slane %v892, %v908
      %v910 = vlaneseq
      %v911 = vshrl.u32 %v910, 7
      %v912 = vsub.s32 4, %v911
      %v913 = vrot.slane %v892, %v912
      %v914 = vlaneseq
      %v915 = vshrl.u32 %v914, 7
      %v916 = vsub.s32 5, %v915
      %v917 = vrot.slane %v892, %v916
      %v918 = vlaneseq
      %v919 = vshrl.u32 %v918, 7
      %v920 = vsub.s32 6, %v919
      %v921 = vrot.slane %v892, %v920
      %v922 = vlaneseq
      %v923 = vshrl.u32 %v922, 7
      %v924 = vsub.s32 7, %v923
      %v925 = vrot.slane %v892, %v924
      %v926 = vcombine.low %v897, %v901
      %v927 = vcombine.low %v905, %v909
      %v928 = vcombine.low %v913, %v917
      %v929 = vcombine.low %v921, %v925
      %930 = vrot.lane.b32.xlu0 %v926, 2
      %v931 = vpop.permute.xlu0 %930
      %932 = vrot.lane.b32.xlu0 %v927, 2
      %v933 = vpop.permute.xlu0 %932
      %934 = vrot.lane.b32.xlu0 %v928, 2
      %v935 = vpop.permute.xlu0 %934
      %936 = vrot.lane.b32.xlu0 %v929, 2
      %v937 = vpop.permute.xlu0 %936
      %v938 = vrot.slane %v931, 4
      %v939 = vrot.slane %v933, 4
      %v940 = vrot.slane %v935, 4
      %v941 = vrot.slane %v937, 4
      %vm942 = vcmask 15360
      %v943 = vsel %vm942, %v938, %v931
      %v944 = vsel %vm816, %v938, %v939
      %v945 = vsel %vm942, %v944, %v933
      %v946 = vsel %vm816, %v939, %v940
      %v947 = vsel %vm942, %v946, %v935
      %v948 = vsel %vm816, %v940, %v941
      %v949 = vsel %vm942, %v948, %v937
      %v955 = vmul.f32 %v886, %v943
      %v956 = vmul.f32 %v887, %v945
      %v957 = vmul.f32 %v888, %v947
      %v958 = vmul.f32 %v889, %v949
      %v959 = vmul.f32 %v890, %v941
      %v965 = vcombine.high %v955, %v955
      %v966 = vcombine.high %v956, %v956
      %v967 = vcombine.high %v957, %v957
      %v968 = vcombine.high %v958, %v958
      %969 = vrot.lane.b32.xlu0 %v955, 126
      %v970 = vpop.permute.xlu0 %969
      %971 = vrot.lane.b32.xlu0 %v965, 126
      %v972 = vpop.permute.xlu0 %971
      %973 = vrot.lane.b32.xlu0 %v956, 126
      %v974 = vpop.permute.xlu0 %973
      %975 = vrot.lane.b32.xlu0 %v966, 126
      %v976 = vpop.permute.xlu0 %975
      %977 = vrot.lane.b32.xlu0 %v957, 126
      %v978 = vpop.permute.xlu0 %977
      %979 = vrot.lane.b32.xlu0 %v967, 126
      %v980 = vpop.permute.xlu0 %979
      %981 = vrot.lane.b32.xlu0 %v958, 126
      %v982 = vpop.permute.xlu0 %981
      %983 = vrot.lane.b32.xlu0 %v968, 126
      %v984 = vpop.permute.xlu0 %983
      %985 = vrot.lane.b32.xlu0 %v959, 126
      %v986 = vpop.permute.xlu0 %985
      %vm987 = vcmask 1031168
      %v988 = vsel %vm987, %v970, %v972
      %v989 = vsel %vm987, %v972, %v974
      %v990 = vsel %vm987, %v974, %v976
      %v991 = vsel %vm987, %v976, %v978
      %v992 = vsel %vm987, %v978, %v980
      %v993 = vsel %vm987, %v980, %v982
      %v994 = vsel %vm987, %v982, %v984
      %v995 = vsel %vm987, %v984, %v986
      %1004 = vst [vmem:[#allocation3 + $0x40] sm:$0xf] %v988
      %1005 = vst [vmem:[#allocation3 + $0x48] sm:$0xf] %v989
      %1006 = vst [vmem:[#allocation3 + $0x50] sm:$0xf] %v990
      %1007 = vst [vmem:[#allocation3 + $0x58] sm:$0xf] %v991
      %1008 = vst [vmem:[#allocation3 + $0x60] sm:$0xf] %v992
      %1009 = vst [vmem:[#allocation3 + $0x68] sm:$0xf] %v993
      %1010 = vst [vmem:[#allocation3 + $0x70] sm:$0xf] %v994
      %1011 = vst [vmem:[#allocation3 + $0x78] sm:$0xf] %v995
      %v1012 = vld [vmem:[#allocation2] sm:$0xff]
      %v1013 = vld [vmem:[#allocation2 + $0x8] sm:$0xff]
      %v1014 = vld [vmem:[#allocation2 + $0x10] sm:$0xff]
      %v1015 = vld [vmem:[#allocation2 + $0x18] sm:$0xff]
      %v1016 = vld [vmem:[#allocation2 + $0x20] sm:$0xf]
      %v1017 = vld [vmem:[%s3] sm:$0xff]
      %v1019 = vlaneseq
      %v1020 = vshrl.u32 %v1019, 7
      %v1021 = vsub.s32 0, %v1020
      %v1022 = vrot.slane %v1017, %v1021
      %v1023 = vlaneseq
      %v1024 = vshrl.u32 %v1023, 7
      %v1025 = vsub.s32 1, %v1024
      %v1026 = vrot.slane %v1017, %v1025
      %v1027 = vlaneseq
      %v1028 = vshrl.u32 %v1027, 7
      %v1029 = vsub.s32 2, %v1028
      %v1030 = vrot.slane %v1017, %v1029
      %v1031 = vlaneseq
      %v1032 = vshrl.u32 %v1031, 7
      %v1033 = vsub.s32 3, %v1032
      %v1034 = vrot.slane %v1017, %v1033
      %v1035 = vlaneseq
      %v1036 = vshrl.u32 %v1035, 7
      %v1037 = vsub.s32 4, %v1036
      %v1038 = vrot.slane %v1017, %v1037
      %v1039 = vlaneseq
      %v1040 = vshrl.u32 %v1039, 7
      %v1041 = vsub.s32 5, %v1040
      %v1042 = vrot.slane %v1017, %v1041
      %v1043 = vlaneseq
      %v1044 = vshrl.u32 %v1043, 7
      %v1045 = vsub.s32 6, %v1044
      %v1046 = vrot.slane %v1017, %v1045
      %v1047 = vlaneseq
      %v1048 = vshrl.u32 %v1047, 7
      %v1049 = vsub.s32 7, %v1048
      %v1050 = vrot.slane %v1017, %v1049
      %v1051 = vcombine.low %v1022, %v1026
      %v1052 = vcombine.low %v1030, %v1034
      %v1053 = vcombine.low %v1038, %v1042
      %v1054 = vcombine.low %v1046, %v1050
      %1055 = vrot.lane.b32.xlu0 %v1051, 32
      %v1056 = vpop.permute.xlu0 %1055
      %1057 = vrot.lane.b32.xlu0 %v1052, 32
      %v1058 = vpop.permute.xlu0 %1057
      %1059 = vrot.lane.b32.xlu0 %v1053, 32
      %v1060 = vpop.permute.xlu0 %1059
      %1061 = vrot.lane.b32.xlu0 %v1054, 32
      %v1062 = vpop.permute.xlu0 %1061
      %v1063 = vrot.slane %v1056, 4
      %v1064 = vrot.slane %v1058, 4
      %v1065 = vrot.slane %v1060, 4
      %v1066 = vrot.slane %v1062, 4
      %vm1067 = vcmask 261120
      %v1068 = vsel %vm1067, %v1063, %v1056
      %v1069 = vsel %vm816, %v1063, %v1064
      %v1070 = vsel %vm1067, %v1069, %v1058
      %v1071 = vsel %vm816, %v1064, %v1065
      %v1072 = vsel %vm1067, %v1071, %v1060
      %v1073 = vsel %vm816, %v1065, %v1066
      %v1074 = vsel %vm1067, %v1073, %v1062
      %v1080 = vmul.f32 %v1012, %v1068
      %v1081 = vmul.f32 %v1013, %v1070
      %v1082 = vmul.f32 %v1014, %v1072
      %v1083 = vmul.f32 %v1015, %v1074
      %v1084 = vmul.f32 %v1016, %v1066
      %v1090 = vcombine.low %v1080, %v1080
      %v1091 = vcombine.low %v1081, %v1081
      %v1092 = vcombine.low %v1082, %v1082
      %v1093 = vcombine.low %v1083, %v1083
      %v1094 = vcombine.low %v1084, %v1084
      %1095 = vrot.lane.b32.xlu0 %v1090, 96
      %v1096 = vpop.permute.xlu0 %1095
      %1097 = vrot.lane.b32.xlu0 %v1080, 96
      %v1098 = vpop.permute.xlu0 %1097
      %1099 = vrot.lane.b32.xlu0 %v1091, 96
      %v1100 = vpop.permute.xlu0 %1099
      %1101 = vrot.lane.b32.xlu0 %v1081, 96
      %v1102 = vpop.permute.xlu0 %1101
      %1103 = vrot.lane.b32.xlu0 %v1092, 96
      %v1104 = vpop.permute.xlu0 %1103
      %1105 = vrot.lane.b32.xlu0 %v1082, 96
      %v1106 = vpop.permute.xlu0 %1105
      %1107 = vrot.lane.b32.xlu0 %v1093, 96
      %v1108 = vpop.permute.xlu0 %1107
      %1109 = vrot.lane.b32.xlu0 %v1083, 96
      %v1110 = vpop.permute.xlu0 %1109
      %1111 = vrot.lane.b32.xlu0 %v1094, 96
      %v1112 = vpop.permute.xlu0 %1111
      %vm1113 = vcmask 785408
      %v1114 = vsel %vm1113, %v1096, %v1098
      %v1115 = vsel %vm1113, %v1098, %v1100
      %v1116 = vsel %vm1113, %v1100, %v1102
      %v1117 = vsel %vm1113, %v1102, %v1104
      %v1118 = vsel %vm1113, %v1104, %v1106
      %v1119 = vsel %vm1113, %v1106, %v1108
      %v1120 = vsel %vm1113, %v1108, %v1110
      %v1121 = vsel %vm1113, %v1110, %v1112
      %1130 = vst [vmem:[#allocation3 + $0x40] sm:$0xf0] %v1114
      %1131 = vst [vmem:[#allocation3 + $0x48] sm:$0xf0] %v1115
      %1132 = vst [vmem:[#allocation3 + $0x50] sm:$0xf0] %v1116
      %1133 = vst [vmem:[#allocation3 + $0x58] sm:$0xf0] %v1117
      %1134 = vst [vmem:[#allocation3 + $0x60] sm:$0xf0] %v1118
      %1135 = vst [vmem:[#allocation3 + $0x68] sm:$0xf0] %v1119
      %1136 = vst [vmem:[#allocation3 + $0x70] sm:$0xf0] %v1120
      %1137 = vst [vmem:[#allocation3 + $0x78] sm:$0xf0] %v1121
      %v1138 = vld [vmem:[#allocation2] sm:$0xff]
      %v1139 = vld [vmem:[#allocation2 + $0x8] sm:$0xff]
      %v1140 = vld [vmem:[#allocation2 + $0x10] sm:$0xff]
      %v1141 = vld [vmem:[#allocation2 + $0x18] sm:$0xff]
      %v1142 = vld [vmem:[#allocation2 + $0x20] sm:$0xf]
      %v1143 = vld [vmem:[%s763] sm:$0xff]
      %v1145 = vlaneseq
      %v1146 = vshrl.u32 %v1145, 7
      %v1147 = vsub.s32 0, %v1146
      %v1148 = vrot.slane %v1143, %v1147
      %v1149 = vlaneseq
      %v1150 = vshrl.u32 %v1149, 7
      %v1151 = vsub.s32 1, %v1150
      %v1152 = vrot.slane %v1143, %v1151
      %v1153 = vlaneseq
      %v1154 = vshrl.u32 %v1153, 7
      %v1155 = vsub.s32 2, %v1154
      %v1156 = vrot.slane %v1143, %v1155
      %v1157 = vlaneseq
      %v1158 = vshrl.u32 %v1157, 7
      %v1159 = vsub.s32 3, %v1158
      %v1160 = vrot.slane %v1143, %v1159
      %v1161 = vlaneseq
      %v1162 = vshrl.u32 %v1161, 7
      %v1163 = vsub.s32 4, %v1162
      %v1164 = vrot.slane %v1143, %v1163
      %v1165 = vlaneseq
      %v1166 = vshrl.u32 %v1165, 7
      %v1167 = vsub.s32 5, %v1166
      %v1168 = vrot.slane %v1143, %v1167
      %v1169 = vlaneseq
      %v1170 = vshrl.u32 %v1169, 7
      %v1171 = vsub.s32 6, %v1170
      %v1172 = vrot.slane %v1143, %v1171
      %v1173 = vlaneseq
      %v1174 = vshrl.u32 %v1173, 7
      %v1175 = vsub.s32 7, %v1174
      %v1176 = vrot.slane %v1143, %v1175
      %v1177 = vcombine.low %v1148, %v1152
      %v1178 = vcombine.low %v1156, %v1160
      %v1179 = vcombine.low %v1164, %v1168
      %v1180 = vcombine.low %v1172, %v1176
      %1181 = vrot.lane.b32.xlu0 %v1177, 33
      %v1182 = vpop.permute.xlu0 %1181
      %1183 = vrot.lane.b32.xlu0 %v1178, 33
      %v1184 = vpop.permute.xlu0 %1183
      %1185 = vrot.lane.b32.xlu0 %v1179, 33
      %v1186 = vpop.permute.xlu0 %1185
      %1187 = vrot.lane.b32.xlu0 %v1180, 33
      %v1188 = vpop.permute.xlu0 %1187
      %v1189 = vrot.slane %v1182, 4
      %v1190 = vrot.slane %v1184, 4
      %v1191 = vrot.slane %v1186, 4
      %v1192 = vrot.slane %v1188, 4
      %vm1193 = vcmask 269312
      %v1194 = vsel %vm1193, %v1189, %v1182
      %v1195 = vsel %vm816, %v1189, %v1190
      %v1196 = vsel %vm1193, %v1195, %v1184
      %v1197 = vsel %vm816, %v1190, %v1191
      %v1198 = vsel %vm1193, %v1197, %v1186
      %v1199 = vsel %vm816, %v1191, %v1192
      %v1200 = vsel %vm1193, %v1199, %v1188
      %v1206 = vmul.f32 %v1138, %v1194
      %v1207 = vmul.f32 %v1139, %v1196
      %v1208 = vmul.f32 %v1140, %v1198
      %v1209 = vmul.f32 %v1141, %v1200
      %v1210 = vmul.f32 %v1142, %v1192
      %v1216 = vcombine.high %v1206, %v1206
      %v1217 = vcombine.high %v1207, %v1207
      %v1218 = vcombine.high %v1208, %v1208
      %v1219 = vcombine.high %v1209, %v1209
      %1220 = vrot.lane.b32.xlu0 %v1206, 95
      %v1221 = vpop.permute.xlu0 %1220
      %1222 = vrot.lane.b32.xlu0 %v1216, 95
      %v1223 = vpop.permute.xlu0 %1222
      %1224 = vrot.lane.b32.xlu0 %v1207, 95
      %v1225 = vpop.permute.xlu0 %1224
      %1226 = vrot.lane.b32.xlu0 %v1217, 95
      %v1227 = vpop.permute.xlu0 %1226
      %1228 = vrot.lane.b32.xlu0 %v1208, 95
      %v1229 = vpop.permute.xlu0 %1228
      %1230 = vrot.lane.b32.xlu0 %v1218, 95
      %v1231 = vpop.permute.xlu0 %1230
      %1232 = vrot.lane.b32.xlu0 %v1209, 95
      %v1233 = vpop.permute.xlu0 %1232
      %1234 = vrot.lane.b32.xlu0 %v1219, 95
      %v1235 = vpop.permute.xlu0 %1234
      %1236 = vrot.lane.b32.xlu0 %v1210, 95
      %v1237 = vpop.permute.xlu0 %1236
      %vm1238 = vcmask 777216
      %v1239 = vsel %vm1238, %v1221, %v1223
      %v1240 = vsel %vm1238, %v1223, %v1225
      %v1241 = vsel %vm1238, %v1225, %v1227
      %v1242 = vsel %vm1238, %v1227, %v1229
      %v1243 = vsel %vm1238, %v1229, %v1231
      %v1244 = vsel %vm1238, %v1231, %v1233
      %v1245 = vsel %vm1238, %v1233, %v1235
      %v1246 = vsel %vm1238, %v1235, %v1237
      %1255 = vst [vmem:[#allocation3 + $0x80] sm:$0xf] %v1239
      %1256 = vst [vmem:[#allocation3 + $0x88] sm:$0xf] %v1240
      %1257 = vst [vmem:[#allocation3 + $0x90] sm:$0xf] %v1241
      %1258 = vst [vmem:[#allocation3 + $0x98] sm:$0xf] %v1242
      %1259 = vst [vmem:[#allocation3 + $0xa0] sm:$0xf] %v1243
      %1260 = vst [vmem:[#allocation3 + $0xa8] sm:$0xf] %v1244
      %1261 = vst [vmem:[#allocation3 + $0xb0] sm:$0xf] %v1245
      %1262 = vst [vmem:[#allocation3 + $0xb8] sm:$0xf] %v1246
      %v1263 = vld [vmem:[#allocation2] sm:$0xff]
      %v1264 = vld [vmem:[#allocation2 + $0x8] sm:$0xff]
      %v1265 = vld [vmem:[#allocation2 + $0x10] sm:$0xff]
      %v1266 = vld [vmem:[#allocation2 + $0x18] sm:$0xff]
      %v1267 = vld [vmem:[#allocation2 + $0x20] sm:$0xf]
      %v1268 = vld [vmem:[%s891] sm:$0xff]
      %v1270 = vlaneseq
      %v1271 = vshrl.u32 %v1270, 7
      %v1272 = vsub.s32 0, %v1271
      %v1273 = vrot.slane %v1268, %v1272
      %v1274 = vlaneseq
      %v1275 = vshrl.u32 %v1274, 7
      %v1276 = vsub.s32 1, %v1275
      %v1277 = vrot.slane %v1268, %v1276
      %v1278 = vlaneseq
      %v1279 = vshrl.u32 %v1278, 7
      %v1280 = vsub.s32 2, %v1279
      %v1281 = vrot.slane %v1268, %v1280
      %v1282 = vlaneseq
      %v1283 = vshrl.u32 %v1282, 7
      %v1284 = vsub.s32 3, %v1283
      %v1285 = vrot.slane %v1268, %v1284
      %v1286 = vlaneseq
      %v1287 = vshrl.u32 %v1286, 7
      %v1288 = vsub.s32 4, %v1287
      %v1289 = vrot.slane %v1268, %v1288
      %v1290 = vlaneseq
      %v1291 = vshrl.u32 %v1290, 7
      %v1292 = vsub.s32 5, %v1291
      %v1293 = vrot.slane %v1268, %v1292
      %v1294 = vlaneseq
      %v1295 = vshrl.u32 %v1294, 7
      %v1296 = vsub.s32 6, %v1295
      %v1297 = vrot.slane %v1268, %v1296
      %v1298 = vlaneseq
      %v1299 = vshrl.u32 %v1298, 7
      %v1300 = vsub.s32 7, %v1299
      %v1301 = vrot.slane %v1268, %v1300
      %v1302 = vcombine.low %v1273, %v1277
      %v1303 = vcombine.low %v1281, %v1285
      %v1304 = vcombine.low %v1289, %v1293
      %v1305 = vcombine.low %v1297, %v1301
      %1306 = vrot.lane.b32.xlu0 %v1302, 34
      %v1307 = vpop.permute.xlu0 %1306
      %1308 = vrot.lane.b32.xlu0 %v1303, 34
      %v1309 = vpop.permute.xlu0 %1308
      %1310 = vrot.lane.b32.xlu0 %v1304, 34
      %v1311 = vpop.permute.xlu0 %1310
      %1312 = vrot.lane.b32.xlu0 %v1305, 34
      %v1313 = vpop.permute.xlu0 %1312
      %v1314 = vrot.slane %v1307, 4
      %v1315 = vrot.slane %v1309, 4
      %v1316 = vrot.slane %v1311, 4
      %v1317 = vrot.slane %v1313, 4
      %vm1318 = vcmask 277504
      %v1319 = vsel %vm1318, %v1314, %v1307
      %v1320 = vsel %vm816, %v1314, %v1315
      %v1321 = vsel %vm1318, %v1320, %v1309
      %v1322 = vsel %vm816, %v1315, %v1316
      %v1323 = vsel %vm1318, %v1322, %v1311
      %v1324 = vsel %vm816, %v1316, %v1317
      %v1325 = vsel %vm1318, %v1324, %v1313
      %v1331 = vmul.f32 %v1263, %v1319
      %v1332 = vmul.f32 %v1264, %v1321
      %v1333 = vmul.f32 %v1265, %v1323
      %v1334 = vmul.f32 %v1266, %v1325
      %v1335 = vmul.f32 %v1267, %v1317
      %v1341 = vcombine.low %v1331, %v1331
      %v1342 = vcombine.low %v1332, %v1332
      %v1343 = vcombine.low %v1333, %v1333
      %v1344 = vcombine.low %v1334, %v1334
      %v1345 = vcombine.low %v1335, %v1335
      %1346 = vrot.lane.b32.xlu0 %v1341, 94
      %v1347 = vpop.permute.xlu0 %1346
      %1348 = vrot.lane.b32.xlu0 %v1331, 94
      %v1349 = vpop.permute.xlu0 %1348
      %1350 = vrot.lane.b32.xlu0 %v1342, 94
      %v1351 = vpop.permute.xlu0 %1350
      %1352 = vrot.lane.b32.xlu0 %v1332, 94
      %v1353 = vpop.permute.xlu0 %1352
      %1354 = vrot.lane.b32.xlu0 %v1343, 94
      %v1355 = vpop.permute.xlu0 %1354
      %1356 = vrot.lane.b32.xlu0 %v1333, 94
      %v1357 = vpop.permute.xlu0 %1356
      %1358 = vrot.lane.b32.xlu0 %v1344, 94
      %v1359 = vpop.permute.xlu0 %1358
      %1360 = vrot.lane.b32.xlu0 %v1334, 94
      %v1361 = vpop.permute.xlu0 %1360
      %1362 = vrot.lane.b32.xlu0 %v1345, 94
      %v1363 = vpop.permute.xlu0 %1362
      %vm1364 = vcmask 769024
      %v1365 = vsel %vm1364, %v1347, %v1349
      %v1366 = vsel %vm1364, %v1349, %v1351
      %v1367 = vsel %vm1364, %v1351, %v1353
      %v1368 = vsel %vm1364, %v1353, %v1355
      %v1369 = vsel %vm1364, %v1355, %v1357
      %v1370 = vsel %vm1364, %v1357, %v1359
      %v1371 = vsel %vm1364, %v1359, %v1361
      %v1372 = vsel %vm1364, %v1361, %v1363
      %1381 = vst [vmem:[#allocation3 + $0x80] sm:$0xf0] %v1365
      %1382 = vst [vmem:[#allocation3 + $0x88] sm:$0xf0] %v1366
      %1383 = vst [vmem:[#allocation3 + $0x90] sm:$0xf0] %v1367
      %1384 = vst [vmem:[#allocation3 + $0x98] sm:$0xf0] %v1368
      %1385 = vst [vmem:[#allocation3 + $0xa0] sm:$0xf0] %v1369
      %1386 = vst [vmem:[#allocation3 + $0xa8] sm:$0xf0] %v1370
      %1387 = vst [vmem:[#allocation3 + $0xb0] sm:$0xf0] %v1371
      %1388 = vst [vmem:[#allocation3 + $0xb8] sm:$0xf0] %v1372
      %v1389 = vld [vmem:[#allocation2] sm:$0xff]
      %v1390 = vld [vmem:[#allocation2 + $0x8] sm:$0xff]
      %v1391 = vld [vmem:[#allocation2 + $0x10] sm:$0xff]
      %v1392 = vld [vmem:[#allocation2 + $0x18] sm:$0xff]
      %v1393 = vld [vmem:[#allocation2 + $0x20] sm:$0xf]
      %v1394 = vld [vmem:[%s3] sm:$0xff]
      %v1396 = vlaneseq
      %v1397 = vshrl.u32 %v1396, 7
      %v1398 = vsub.s32 0, %v1397
      %v1399 = vrot.slane %v1394, %v1398
      %v1400 = vlaneseq
      %v1401 = vshrl.u32 %v1400, 7
      %v1402 = vsub.s32 1, %v1401
      %v1403 = vrot.slane %v1394, %v1402
      %v1404 = vlaneseq
      %v1405 = vshrl.u32 %v1404, 7
      %v1406 = vsub.s32 2, %v1405
      %v1407 = vrot.slane %v1394, %v1406
      %v1408 = vlaneseq
      %v1409 = vshrl.u32 %v1408, 7
      %v1410 = vsub.s32 3, %v1409
      %v1411 = vrot.slane %v1394, %v1410
      %v1412 = vlaneseq
      %v1413 = vshrl.u32 %v1412, 7
      %v1414 = vsub.s32 4, %v1413
      %v1415 = vrot.slane %v1394, %v1414
      %v1416 = vlaneseq
      %v1417 = vshrl.u32 %v1416, 7
      %v1418 = vsub.s32 5, %v1417
      %v1419 = vrot.slane %v1394, %v1418
      %v1420 = vlaneseq
      %v1421 = vshrl.u32 %v1420, 7
      %v1422 = vsub.s32 6, %v1421
      %v1423 = vrot.slane %v1394, %v1422
      %v1424 = vlaneseq
      %v1425 = vshrl.u32 %v1424, 7
      %v1426 = vsub.s32 7, %v1425
      %v1427 = vrot.slane %v1394, %v1426
      %v1428 = vcombine.low %v1399, %v1403
      %v1429 = vcombine.low %v1407, %v1411
      %v1430 = vcombine.low %v1415, %v1419
      %v1431 = vcombine.low %v1423, %v1427
      %1432 = vrot.lane.b32.xlu0 %v1428, 64
      %v1433 = vpop.permute.xlu0 %1432
      %1434 = vrot.lane.b32.xlu0 %v1429, 64
      %v1435 = vpop.permute.xlu0 %1434
      %1436 = vrot.lane.b32.xlu0 %v1430, 64
      %v1437 = vpop.permute.xlu0 %1436
      %1438 = vrot.lane.b32.xlu0 %v1431, 64
      %v1439 = vpop.permute.xlu0 %1438
      %v1440 = vrot.slane %v1433, 4
      %v1441 = vrot.slane %v1435, 4
      %v1442 = vrot.slane %v1437, 4
      %v1443 = vrot.slane %v1439, 4
      %vm1444 = vcmask 523264
      %v1445 = vsel %vm1444, %v1440, %v1433
      %v1446 = vsel %vm816, %v1440, %v1441
      %v1447 = vsel %vm1444, %v1446, %v1435
      %v1448 = vsel %vm816, %v1441, %v1442
      %v1449 = vsel %vm1444, %v1448, %v1437
      %v1450 = vsel %vm816, %v1442, %v1443
      %v1451 = vsel %vm1444, %v1450, %v1439
      %v1457 = vmul.f32 %v1389, %v1445
      %v1458 = vmul.f32 %v1390, %v1447
      %v1459 = vmul.f32 %v1391, %v1449
      %v1460 = vmul.f32 %v1392, %v1451
      %v1461 = vmul.f32 %v1393, %v1443
      %v1467 = vcombine.high %v1457, %v1457
      %v1468 = vcombine.high %v1458, %v1458
      %v1469 = vcombine.high %v1459, %v1459
      %v1470 = vcombine.high %v1460, %v1460
      %1471 = vrot.lane.b32.xlu0 %v1457, 64
      %v1472 = vpop.permute.xlu0 %1471
      %1473 = vrot.lane.b32.xlu0 %v1467, 64
      %v1474 = vpop.permute.xlu0 %1473
      %1475 = vrot.lane.b32.xlu0 %v1458, 64
      %v1476 = vpop.permute.xlu0 %1475
      %1477 = vrot.lane.b32.xlu0 %v1468, 64
      %v1478 = vpop.permute.xlu0 %1477
      %1479 = vrot.lane.b32.xlu0 %v1459, 64
      %v1480 = vpop.permute.xlu0 %1479
      %1481 = vrot.lane.b32.xlu0 %v1469, 64
      %v1482 = vpop.permute.xlu0 %1481
      %1483 = vrot.lane.b32.xlu0 %v1460, 64
      %v1484 = vpop.permute.xlu0 %1483
      %1485 = vrot.lane.b32.xlu0 %v1470, 64
      %v1486 = vpop.permute.xlu0 %1485
      %1487 = vrot.lane.b32.xlu0 %v1461, 64
      %v1488 = vpop.permute.xlu0 %1487
      %v1489 = vsel %vm1444, %v1472, %v1474
      %v1490 = vsel %vm1444, %v1474, %v1476
      %v1491 = vsel %vm1444, %v1476, %v1478
      %v1492 = vsel %vm1444, %v1478, %v1480
      %v1493 = vsel %vm1444, %v1480, %v1482
      %v1494 = vsel %vm1444, %v1482, %v1484
      %v1495 = vsel %vm1444, %v1484, %v1486
      %v1496 = vsel %vm1444, %v1486, %v1488
      %1505 = vst [vmem:[#allocation3 + $0xc0] sm:$0xf] %v1489
      %1506 = vst [vmem:[#allocation3 + $0xc8] sm:$0xf] %v1490
      %1507 = vst [vmem:[#allocation3 + $0xd0] sm:$0xf] %v1491
      %1508 = vst [vmem:[#allocation3 + $0xd8] sm:$0xf] %v1492
      %1509 = vst [vmem:[#allocation3 + $0xe0] sm:$0xf] %v1493
      %1510 = vst [vmem:[#allocation3 + $0xe8] sm:$0xf] %v1494
      %1511 = vst [vmem:[#allocation3 + $0xf0] sm:$0xf] %v1495
      %1512 = vst [vmem:[#allocation3 + $0xf8] sm:$0xf] %v1496
      %v1513 = vld [vmem:[#allocation2] sm:$0xff]
      %v1514 = vld [vmem:[#allocation2 + $0x8] sm:$0xff]
      %v1515 = vld [vmem:[#allocation2 + $0x10] sm:$0xff]
      %v1516 = vld [vmem:[#allocation2 + $0x18] sm:$0xff]
      %v1517 = vld [vmem:[#allocation2 + $0x20] sm:$0xf]
      %v1518 = vld [vmem:[%s763] sm:$0xff]
      %v1520 = vlaneseq
      %v1521 = vshrl.u32 %v1520, 7
      %v1522 = vsub.s32 0, %v1521
      %v1523 = vrot.slane %v1518, %v1522
      %v1524 = vlaneseq
      %v1525 = vshrl.u32 %v1524, 7
      %v1526 = vsub.s32 1, %v1525
      %v1527 = vrot.slane %v1518, %v1526
      %v1528 = vlaneseq
      %v1529 = vshrl.u32 %v1528, 7
      %v1530 = vsub.s32 2, %v1529
      %v1531 = vrot.slane %v1518, %v1530
      %v1532 = vlaneseq
      %v1533 = vshrl.u32 %v1532, 7
      %v1534 = vsub.s32 3, %v1533
      %v1535 = vrot.slane %v1518, %v1534
      %v1536 = vlaneseq
      %v1537 = vshrl.u32 %v1536, 7
      %v1538 = vsub.s32 4, %v1537
      %v1539 = vrot.slane %v1518, %v1538
      %v1540 = vlaneseq
      %v1541 = vshrl.u32 %v1540, 7
      %v1542 = vsub.s32 5, %v1541
      %v1543 = vrot.slane %v1518, %v1542
      %v1544 = vlaneseq
      %v1545 = vshrl.u32 %v1544, 7
      %v1546 = vsub.s32 6, %v1545
      %v1547 = vrot.slane %v1518, %v1546
      %v1548 = vlaneseq
      %v1549 = vshrl.u32 %v1548, 7
      %v1550 = vsub.s32 7, %v1549
      %v1551 = vrot.slane %v1518, %v1550
      %v1552 = vcombine.low %v1523, %v1527
      %v1553 = vcombine.low %v1531, %v1535
      %v1554 = vcombine.low %v1539, %v1543
      %v1555 = vcombine.low %v1547, %v1551
      %1556 = vrot.lane.b32.xlu0 %v1552, 65
      %v1557 = vpop.permute.xlu0 %1556
      %1558 = vrot.lane.b32.xlu0 %v1553, 65
      %v1559 = vpop.permute.xlu0 %1558
      %1560 = vrot.lane.b32.xlu0 %v1554, 65
      %v1561 = vpop.permute.xlu0 %1560
      %1562 = vrot.lane.b32.xlu0 %v1555, 65
      %v1563 = vpop.permute.xlu0 %1562
      %v1564 = vrot.slane %v1557, 4
      %v1565 = vrot.slane %v1559, 4
      %v1566 = vrot.slane %v1561, 4
      %v1567 = vrot.slane %v1563, 4
      %vm1568 = vcmask 531456
      %v1569 = vsel %vm1568, %v1564, %v1557
      %v1570 = vsel %vm816, %v1564, %v1565
      %v1571 = vsel %vm1568, %v1570, %v1559
      %v1572 = vsel %vm816, %v1565, %v1566
      %v1573 = vsel %vm1568, %v1572, %v1561
      %v1574 = vsel %vm816, %v1566, %v1567
      %v1575 = vsel %vm1568, %v1574, %v1563
      %v1581 = vmul.f32 %v1513, %v1569
      %v1582 = vmul.f32 %v1514, %v1571
      %v1583 = vmul.f32 %v1515, %v1573
      %v1584 = vmul.f32 %v1516, %v1575
      %v1585 = vmul.f32 %v1517, %v1567
      %v1591 = vcombine.low %v1581, %v1581
      %v1592 = vcombine.low %v1582, %v1582
      %v1593 = vcombine.low %v1583, %v1583
      %v1594 = vcombine.low %v1584, %v1584
      %v1595 = vcombine.low %v1585, %v1585
      %1596 = vrot.lane.b32.xlu0 %v1591, 63
      %v1597 = vpop.permute.xlu0 %1596
      %1598 = vrot.lane.b32.xlu0 %v1581, 63
      %v1599 = vpop.permute.xlu0 %1598
      %1600 = vrot.lane.b32.xlu0 %v1592, 63
      %v1601 = vpop.permute.xlu0 %1600
      %1602 = vrot.lane.b32.xlu0 %v1582, 63
      %v1603 = vpop.permute.xlu0 %1602
      %1604 = vrot.lane.b32.xlu0 %v1593, 63
      %v1605 = vpop.permute.xlu0 %1604
      %1606 = vrot.lane.b32.xlu0 %v1583, 63
      %v1607 = vpop.permute.xlu0 %1606
      %1608 = vrot.lane.b32.xlu0 %v1594, 63
      %v1609 = vpop.permute.xlu0 %1608
      %1610 = vrot.lane.b32.xlu0 %v1584, 63
      %v1611 = vpop.permute.xlu0 %1610
      %1612 = vrot.lane.b32.xlu0 %v1595, 63
      %v1613 = vpop.permute.xlu0 %1612
      %vm1614 = vcmask 515072
      %v1615 = vsel %vm1614, %v1597, %v1599
      %v1616 = vsel %vm1614, %v1599, %v1601
      %v1617 = vsel %vm1614, %v1601, %v1603
      %v1618 = vsel %vm1614, %v1603, %v1605
      %v1619 = vsel %vm1614, %v1605, %v1607
      %v1620 = vsel %vm1614, %v1607, %v1609
      %v1621 = vsel %vm1614, %v1609, %v1611
      %v1622 = vsel %vm1614, %v1611, %v1613
      %1631 = vst [vmem:[#allocation3 + $0xc0] sm:$0xf0] %v1615
      %1632 = vst [vmem:[#allocation3 + $0xc8] sm:$0xf0] %v1616
      %1633 = vst [vmem:[#allocation3 + $0xd0] sm:$0xf0] %v1617
      %1634 = vst [vmem:[#allocation3 + $0xd8] sm:$0xf0] %v1618
      %1635 = vst [vmem:[#allocation3 + $0xe0] sm:$0xf0] %v1619
      %1636 = vst [vmem:[#allocation3 + $0xe8] sm:$0xf0] %v1620
      %1637 = vst [vmem:[#allocation3 + $0xf0] sm:$0xf0] %v1621
      %1638 = vst [vmem:[#allocation3 + $0xf8] sm:$0xf0] %v1622
      %v1639 = vld [vmem:[#allocation2] sm:$0xff]
      %v1640 = vld [vmem:[#allocation2 + $0x8] sm:$0xff]
      %v1641 = vld [vmem:[#allocation2 + $0x10] sm:$0xff]
      %v1642 = vld [vmem:[#allocation2 + $0x18] sm:$0xff]
      %v1643 = vld [vmem:[#allocation2 + $0x20] sm:$0xf]
      %v1644 = vld [vmem:[%s891] sm:$0xff]
      %v1646 = vlaneseq
      %v1647 = vshrl.u32 %v1646, 7
      %v1648 = vsub.s32 0, %v1647
      %v1649 = vrot.slane %v1644, %v1648
      %v1650 = vlaneseq
      %v1651 = vshrl.u32 %v1650, 7
      %v1652 = vsub.s32 1, %v1651
      %v1653 = vrot.slane %v1644, %v1652
      %v1654 = vlaneseq
      %v1655 = vshrl.u32 %v1654, 7
      %v1656 = vsub.s32 2, %v1655
      %v1657 = vrot.slane %v1644, %v1656
      %v1658 = vlaneseq
      %v1659 = vshrl.u32 %v1658, 7
      %v1660 = vsub.s32 3, %v1659
      %v1661 = vrot.slane %v1644, %v1660
      %v1662 = vlaneseq
      %v1663 = vshrl.u32 %v1662, 7
      %v1664 = vsub.s32 4, %v1663
      %v1665 = vrot.slane %v1644, %v1664
      %v1666 = vlaneseq
      %v1667 = vshrl.u32 %v1666, 7
      %v1668 = vsub.s32 5, %v1667
      %v1669 = vrot.slane %v1644, %v1668
      %v1670 = vlaneseq
      %v1671 = vshrl.u32 %v1670, 7
      %v1672 = vsub.s32 6, %v1671
      %v1673 = vrot.slane %v1644, %v1672
      %v1674 = vlaneseq
      %v1675 = vshrl.u32 %v1674, 7
      %v1676 = vsub.s32 7, %v1675
      %v1677 = vrot.slane %v1644, %v1676
      %v1678 = vcombine.low %v1649, %v1653
      %v1679 = vcombine.low %v1657, %v1661
      %v1680 = vcombine.low %v1665, %v1669
      %v1681 = vcombine.low %v1673, %v1677
      %1682 = vrot.lane.b32.xlu0 %v1678, 66
      %v1683 = vpop.permute.xlu0 %1682
      %1684 = vrot.lane.b32.xlu0 %v1679, 66
      %v1685 = vpop.permute.xlu0 %1684
      %1686 = vrot.lane.b32.xlu0 %v1680, 66
      %v1687 = vpop.permute.xlu0 %1686
      %1688 = vrot.lane.b32.xlu0 %v1681, 66
      %v1689 = vpop.permute.xlu0 %1688
      %v1690 = vrot.slane %v1683, 4
      %v1691 = vrot.slane %v1685, 4
      %v1692 = vrot.slane %v1687, 4
      %v1693 = vrot.slane %v1689, 4
      %vm1694 = vcmask 539648
      %v1695 = vsel %vm1694, %v1690, %v1683
      %v1696 = vsel %vm816, %v1690, %v1691
      %v1697 = vsel %vm1694, %v1696, %v1685
      %v1698 = vsel %vm816, %v1691, %v1692
      %v1699 = vsel %vm1694, %v1698, %v1687
      %v1700 = vsel %vm816, %v1692, %v1693
      %v1701 = vsel %vm1694, %v1700, %v1689
      %v1707 = vmul.f32 %v1639, %v1695
      %v1708 = vmul.f32 %v1640, %v1697
      %v1709 = vmul.f32 %v1641, %v1699
      %v1710 = vmul.f32 %v1642, %v1701
      %v1711 = vmul.f32 %v1643, %v1693
      %v1717 = vcombine.high %v1707, %v1707
      %v1718 = vcombine.high %v1708, %v1708
      %v1719 = vcombine.high %v1709, %v1709
      %v1720 = vcombine.high %v1710, %v1710
      %1721 = vrot.lane.b32.xlu0 %v1707, 62
      %v1722 = vpop.permute.xlu0 %1721
      %1723 = vrot.lane.b32.xlu0 %v1717, 62
      %v1724 = vpop.permute.xlu0 %1723
      %1725 = vrot.lane.b32.xlu0 %v1708, 62
      %v1726 = vpop.permute.xlu0 %1725
      %1727 = vrot.lane.b32.xlu0 %v1718, 62
      %v1728 = vpop.permute.xlu0 %1727
      %1729 = vrot.lane.b32.xlu0 %v1709, 62
      %v1730 = vpop.permute.xlu0 %1729
      %1731 = vrot.lane.b32.xlu0 %v1719, 62
      %v1732 = vpop.permute.xlu0 %1731
      %1733 = vrot.lane.b32.xlu0 %v1710, 62
      %v1734 = vpop.permute.xlu0 %1733
      %1735 = vrot.lane.b32.xlu0 %v1720, 62
      %v1736 = vpop.permute.xlu0 %1735
      %1737 = vrot.lane.b32.xlu0 %v1711, 62
      %v1738 = vpop.permute.xlu0 %1737
      %vm1739 = vcmask 506880
      %v1740 = vsel %vm1739, %v1722, %v1724
      %v1741 = vsel %vm1739, %v1724, %v1726
      %v1742 = vsel %vm1739, %v1726, %v1728
      %v1743 = vsel %vm1739, %v1728, %v1730
      %v1744 = vsel %vm1739, %v1730, %v1732
      %v1745 = vsel %vm1739, %v1732, %v1734
      %v1746 = vsel %vm1739, %v1734, %v1736
      %v1747 = vsel %vm1739, %v1736, %v1738
      %1756 = vst [vmem:[#allocation3 + $0x100] sm:$0xf] %v1740
      %1757 = vst [vmem:[#allocation3 + $0x108] sm:$0xf] %v1741
      %1758 = vst [vmem:[#allocation3 + $0x110] sm:$0xf] %v1742
      %1759 = vst [vmem:[#allocation3 + $0x118] sm:$0xf] %v1743
      %1760 = vst [vmem:[#allocation3 + $0x120] sm:$0xf] %v1744
      %1761 = vst [vmem:[#allocation3 + $0x128] sm:$0xf] %v1745
      %1762 = vst [vmem:[#allocation3 + $0x130] sm:$0xf] %v1746
      %1763 = vst [vmem:[#allocation3 + $0x138] sm:$0xf] %v1747
      %v1764 = vld [vmem:[%s2] sm:$0xff]
      %v1765 = vld [vmem:[#allocation3] sm:$0xff]
      %v1766 = vld [vmem:[#allocation3 + $0x8] sm:$0xff]
      %v1767 = vld [vmem:[#allocation3 + $0x10] sm:$0xff]
      %v1768 = vld [vmem:[#allocation3 + $0x18] sm:$0xff]
      %v1769 = vld [vmem:[#allocation3 + $0x20] sm:$0xff]
      %v1770 = vld [vmem:[#allocation3 + $0x28] sm:$0xff]
      %v1771 = vld [vmem:[#allocation3 + $0x30] sm:$0xff]
      %v1772 = vld [vmem:[#allocation3 + $0x38] sm:$0xff]
      %v1773 = vld [vmem:[#allocation3 + $0x40] sm:$0xff]
      %v1774 = vld [vmem:[#allocation3 + $0x48] sm:$0xff]
      %v1775 = vld [vmem:[#allocation3 + $0x50] sm:$0xff]
      %v1776 = vld [vmem:[#allocation3 + $0x58] sm:$0xff]
      %v1777 = vld [vmem:[#allocation3 + $0x60] sm:$0xff]
      %v1778 = vld [vmem:[#allocation3 + $0x68] sm:$0xff]
      %v1779 = vld [vmem:[#allocation3 + $0x70] sm:$0xff]
      %v1780 = vld [vmem:[#allocation3 + $0x78] sm:$0xff]
      %v1781 = vld [vmem:[#allocation3 + $0x80] sm:$0xff]
      %v1782 = vld [vmem:[#allocation3 + $0x88] sm:$0xff]
      %v1783 = vld [vmem:[#allocation3 + $0x90] sm:$0xff]
      %v1784 = vld [vmem:[#allocation3 + $0x98] sm:$0xff]
      %v1785 = vld [vmem:[#allocation3 + $0xa0] sm:$0xff]
      %v1786 = vld [vmem:[#allocation3 + $0xa8] sm:$0xff]
      %v1787 = vld [vmem:[#allocation3 + $0xb0] sm:$0xff]
      %v1788 = vld [vmem:[#allocation3 + $0xb8] sm:$0xff]
      %v1789 = vld [vmem:[#allocation3 + $0xc0] sm:$0xff]
      %v1790 = vld [vmem:[#allocation3 + $0xc8] sm:$0xff]
      %v1791 = vld [vmem:[#allocation3 + $0xd0] sm:$0xff]
      %v1792 = vld [vmem:[#allocation3 + $0xd8] sm:$0xff]
      %v1793 = vld [vmem:[#allocation3 + $0xe0] sm:$0xff]
      %v1794 = vld [vmem:[#allocation3 + $0xe8] sm:$0xff]
      %v1795 = vld [vmem:[#allocation3 + $0xf0] sm:$0xff]
      %v1796 = vld [vmem:[#allocation3 + $0xf8] sm:$0xff]
      %v1797 = vld [vmem:[#allocation3 + $0x100] sm:$0xf]
      %v1798 = vld [vmem:[#allocation3 + $0x108] sm:$0xf]
      %v1799 = vld [vmem:[#allocation3 + $0x110] sm:$0xf]
      %v1800 = vld [vmem:[#allocation3 + $0x118] sm:$0xf]
      %v1801 = vld [vmem:[#allocation3 + $0x120] sm:$0xf]
      %v1802 = vld [vmem:[#allocation3 + $0x128] sm:$0xf]
      %v1803 = vld [vmem:[#allocation3 + $0x130] sm:$0xf]
      %v1804 = vld [vmem:[#allocation3 + $0x138] sm:$0xf]
      %v1805 = vld [vmem:[%s4] sm:$0xff]
      %1807 = vset.pattern.permute.xlu0 0
      %1808 = vperm.xlu0 %1807, %v1805
      %v1809 = vpop.permute.xlu0 %1808
      %vm1811 = vcmask 293888
      %v1813 = vsel %vm1811, %v1764, 0
      %v1816 = vsel %vm816, %v1797, 0
      %v1819 = vsel %vm816, %v1798, 0
      %v1822 = vsel %vm816, %v1799, 0
      %v1825 = vsel %vm816, %v1800, 0
      %v1828 = vsel %vm816, %v1801, 0
      %v1831 = vsel %vm816, %v1802, 0
      %v1834 = vsel %vm816, %v1803, 0
      %v1837 = vsel %vm816, %v1804, 0
      %1839 = vmatprep.subr.mxu0 %v1766
      %1840 = vmatpush1.msra.mxu0 %v1765
      %1841 = vmatprep.subr.mxu0 %v1774
      %1842 = vmatpush1.msra.mxu0 %v1773
      %1843 = vmatprep.subr.mxu0 %v1782
      %1844 = vmatpush1.msra.mxu0 %v1781
      %1845 = vmatprep.subr.mxu0 %v1790
      %1846 = vmatpush1.msra.mxu0 %v1789
      %1847 = vmatprep.subr.mxu0 %v1819
      %1848 = vmatpush1.msra.mxu0 %v1816
      %1849 = vmatprep.subr.mxu0 0.0
      %1850 = vmatpush1.msra.mxu0 0.0
      %1851 = vmatprep.subr.mxu0 0.0
      %1852 = vmatpush1.msra.mxu0 0.0
      %1853 = vmatprep.subr.mxu0 0.0
      %1854 = vmatpush1.msra.mxu0 0.0
      %1855 = vmatprep.subr.mxu0 0.0
      %1856 = vmatpush1.msra.mxu0 0.0
      %1857 = vmatprep.subr.mxu0 0.0
      %1858 = vmatpush1.msra.mxu0 0.0
      %1859 = vmatprep.subr.mxu0 0.0
      %1860 = vmatpush1.msra.mxu0 0.0
      %1861 = vmatprep.subr.mxu0 0.0
      %1862 = vmatpush1.msra.mxu0 0.0
      %1863 = vmatprep.subr.mxu0 0.0
      %1864 = vmatpush1.msra.mxu0 0.0
      %1865 = vmatprep.subr.mxu0 0.0
      %1866 = vmatpush1.msra.mxu0 0.0
      %1867 = vmatprep.subr.mxu0 0.0
      %1868 = vmatpush1.msra.mxu0 0.0
      %1869 = vmatprep.subr.mxu0 0.0
      %1870 = vmatpush1.msra.mxu0 0.0
      %1871 = vmatprep.subr.mxu0 0.0
      %1872 = vmatpush1.msra.mxu0 0.0
      %1873 = vmatprep.subr.mxu0 0.0
      %1874 = vmatpush1.msra.mxu0 0.0
      %1875 = vmatprep.subr.mxu0 0.0
      %1876 = vmatpush1.msra.mxu0 0.0
      %1877 = vmatprep.subr.mxu0 0.0
      %1878 = vmatpush1.msra.mxu0 0.0
      %1879 = vmatprep.subr.mxu0 0.0
      %1880 = vmatpush1.msra.mxu0 0.0
      %1881 = vmatprep.subr.mxu0 0.0
      %1882 = vmatpush1.msra.mxu0 0.0
      %1883 = vmatprep.subr.mxu0 0.0
      %1884 = vmatpush1.msra.mxu0 0.0
      %1885 = vmatprep.subr.mxu0 0.0
      %1886 = vmatpush1.msra.mxu0 0.0
      %1887 = vmatprep.subr.mxu0 0.0
      %1888 = vmatpush1.msra.mxu0 0.0
      %1889 = vmatprep.subr.mxu0 0.0
      %1890 = vmatpush1.msra.mxu0 0.0
      %1891 = vmatprep.subr.mxu0 0.0
      %1892 = vmatpush1.msra.mxu0 0.0
      %1893 = vmatprep.subr.mxu0 0.0
      %1894 = vmatpush1.msra.mxu0 0.0
      %1895 = vmatprep.subr.mxu0 0.0
      %1896 = vmatpush1.msra.mxu0 0.0
      %1897 = vmatprep.subr.mxu0 0.0
      %1898 = vmatpush1.msra.mxu0 0.0
      %1899 = vmatprep.subr.mxu0 0.0
      %1900 = vmatpush1.msra.mxu0 0.0
      %1901 = vmatprep.subr.mxu0 0.0
      %1902 = vmatpush1.msra.mxu0 0.0
      %1903 = vmatprep.mubr.f32.mxu0 0.0
      %1904 = vmatmul.mubr.f32.gmra.mrb[0].mxu0 %v1813
      %v1905 = vpop.f32.mrb[0].mxu0
      %v1906 = vadd.f32 %v1809, %v1905
      %v1907 = vpop.f32.mrb[0].mxu0
      %v1908 = vadd.f32 %v1809, %v1907
      %1909 = vdwg.mxu0
      %1910 = vmatprep.subr.mxu0 %v1768
      %1911 = vmatpush1.msra.mxu0 %v1767
      %1912 = vmatprep.subr.mxu0 %v1776
      %1913 = vmatpush1.msra.mxu0 %v1775
      %1914 = vmatprep.subr.mxu0 %v1784
      %1915 = vmatpush1.msra.mxu0 %v1783
      %1916 = vmatprep.subr.mxu0 %v1792
      %1917 = vmatpush1.msra.mxu0 %v1791
      %1918 = vmatprep.subr.mxu0 %v1825
      %1919 = vmatpush1.msra.mxu0 %v1822
      %1920 = vmatprep.subr.mxu0 0.0
      %1921 = vmatpush1.msra.mxu0 0.0
      %1922 = vmatprep.subr.mxu0 0.0
      %1923 = vmatpush1.msra.mxu0 0.0
      %1924 = vmatprep.subr.mxu0 0.0
      %1925 = vmatpush1.msra.mxu0 0.0
      %1926 = vmatprep.subr.mxu0 0.0
      %1927 = vmatpush1.msra.mxu0 0.0
      %1928 = vmatprep.subr.mxu0 0.0
      %1929 = vmatpush1.msra.mxu0 0.0
      %1930 = vmatprep.subr.mxu0 0.0
      %1931 = vmatpush1.msra.mxu0 0.0
      %1932 = vmatprep.subr.mxu0 0.0
      %1933 = vmatpush1.msra.mxu0 0.0
      %1934 = vmatprep.subr.mxu0 0.0
      %1935 = vmatpush1.msra.mxu0 0.0
      %1936 = vmatprep.subr.mxu0 0.0
      %1937 = vmatpush1.msra.mxu0 0.0
      %1938 = vmatprep.subr.mxu0 0.0
      %1939 = vmatpush1.msra.mxu0 0.0
      %1940 = vmatprep.subr.mxu0 0.0
      %1941 = vmatpush1.msra.mxu0 0.0
      %1942 = vmatprep.subr.mxu0 0.0
      %1943 = vmatpush1.msra.mxu0 0.0
      %1944 = vmatprep.subr.mxu0 0.0
      %1945 = vmatpush1.msra.mxu0 0.0
      %1946 = vmatprep.subr.mxu0 0.0
      %1947 = vmatpush1.msra.mxu0 0.0
      %1948 = vmatprep.subr.mxu0 0.0
      %1949 = vmatpush1.msra.mxu0 0.0
      %1950 = vmatprep.subr.mxu0 0.0
      %1951 = vmatpush1.msra.mxu0 0.0
      %1952 = vmatprep.subr.mxu0 0.0
      %1953 = vmatpush1.msra.mxu0 0.0
      %1954 = vmatprep.subr.mxu0 0.0
      %1955 = vmatpush1.msra.mxu0 0.0
      %1956 = vmatprep.subr.mxu0 0.0
      %1957 = vmatpush1.msra.mxu0 0.0
      %1958 = vmatprep.subr.mxu0 0.0
      %1959 = vmatpush1.msra.mxu0 0.0
      %1960 = vmatprep.subr.mxu0 0.0
      %1961 = vmatpush1.msra.mxu0 0.0
      %1962 = vmatprep.subr.mxu0 0.0
      %1963 = vmatpush1.msra.mxu0 0.0
      %1964 = vmatprep.subr.mxu0 0.0
      %1965 = vmatpush1.msra.mxu0 0.0
      %1966 = vmatprep.subr.mxu0 0.0
      %1967 = vmatpush1.msra.mxu0 0.0
      %1968 = vmatprep.subr.mxu0 0.0
      %1969 = vmatpush1.msra.mxu0 0.0
      %1970 = vmatprep.subr.mxu0 0.0
      %1971 = vmatpush1.msra.mxu0 0.0
      %1972 = vmatprep.subr.mxu0 0.0
      %1973 = vmatpush1.msra.mxu0 0.0
      %1974 = vmatprep.mubr.f32.mxu0 0.0
      %1975 = vmatmul.mubr.f32.gmra.mrb[0].mxu0 %v1813
      %v1976 = vpop.f32.mrb[0].mxu0
      %v1977 = vadd.f32 %v1809, %v1976
      %v1978 = vpop.f32.mrb[0].mxu0
      %v1979 = vadd.f32 %v1809, %v1978
      %1980 = vdwg.mxu0
      %1981 = vmatprep.subr.mxu0 %v1770
      %1982 = vmatpush1.msra.mxu0 %v1769
      %1983 = vmatprep.subr.mxu0 %v1778
      %1984 = vmatpush1.msra.mxu0 %v1777
      %1985 = vmatprep.subr.mxu0 %v1786
      %1986 = vmatpush1.msra.mxu0 %v1785
      %1987 = vmatprep.subr.mxu0 %v1794
      %1988 = vmatpush1.msra.mxu0 %v1793
      %1989 = vmatprep.subr.mxu0 %v1831
      %1990 = vmatpush1.msra.mxu0 %v1828
      %1991 = vmatprep.subr.mxu0 0.0
      %1992 = vmatpush1.msra.mxu0 0.0
      %1993 = vmatprep.subr.mxu0 0.0
      %1994 = vmatpush1.msra.mxu0 0.0
      %1995 = vmatprep.subr.mxu0 0.0
      %1996 = vmatpush1.msra.mxu0 0.0
      %1997 = vmatprep.subr.mxu0 0.0
      %1998 = vmatpush1.msra.mxu0 0.0
      %1999 = vmatprep.subr.mxu0 0.0
      %2000 = vmatpush1.msra.mxu0 0.0
      %2001 = vmatprep.subr.mxu0 0.0
      %2002 = vmatpush1.msra.mxu0 0.0
      %2003 = vmatprep.subr.mxu0 0.0
      %2004 = vmatpush1.msra.mxu0 0.0
      %2005 = vmatprep.subr.mxu0 0.0
      %2006 = vmatpush1.msra.mxu0 0.0
      %2007 = vmatprep.subr.mxu0 0.0
      %2008 = vmatpush1.msra.mxu0 0.0
      %2009 = vmatprep.subr.mxu0 0.0
      %2010 = vmatpush1.msra.mxu0 0.0
      %2011 = vmatprep.subr.mxu0 0.0
      %2012 = vmatpush1.msra.mxu0 0.0
      %2013 = vmatprep.subr.mxu0 0.0
      %2014 = vmatpush1.msra.mxu0 0.0
      %2015 = vmatprep.subr.mxu0 0.0
      %2016 = vmatpush1.msra.mxu0 0.0
      %2017 = vmatprep.subr.mxu0 0.0
      %2018 = vmatpush1.msra.mxu0 0.0
      %2019 = vmatprep.subr.mxu0 0.0
      %2020 = vmatpush1.msra.mxu0 0.0
      %2021 = vmatprep.subr.mxu0 0.0
      %2022 = vmatpush1.msra.mxu0 0.0
      %2023 = vmatprep.subr.mxu0 0.0
      %2024 = vmatpush1.msra.mxu0 0.0
      %2025 = vmatprep.subr.mxu0 0.0
      %2026 = vmatpush1.msra.mxu0 0.0
      %2027 = vmatprep.subr.mxu0 0.0
      %2028 = vmatpush1.msra.mxu0 0.0
      %2029 = vmatprep.subr.mxu0 0.0
      %2030 = vmatpush1.msra.mxu0 0.0
      %2031 = vmatprep.subr.mxu0 0.0
      %2032 = vmatpush1.msra.mxu0 0.0
      %2033 = vmatprep.subr.mxu0 0.0
      %2034 = vmatpush1.msra.mxu0 0.0
      %2035 = vmatprep.subr.mxu0 0.0
      %2036 = vmatpush1.msra.mxu0 0.0
      %2037 = vmatprep.subr.mxu0 0.0
      %2038 = vmatpush1.msra.mxu0 0.0
      %2039 = vmatprep.subr.mxu0 0.0
      %2040 = vmatpush1.msra.mxu0 0.0
      %2041 = vmatprep.subr.mxu0 0.0
      %2042 = vmatpush1.msra.mxu0 0.0
      %2043 = vmatprep.subr.mxu0 0.0
      %2044 = vmatpush1.msra.mxu0 0.0
      %2045 = vmatprep.mubr.f32.mxu0 0.0
      %2046 = vmatmul.mubr.f32.gmra.mrb[0].mxu0 %v1813
      %v2047 = vpop.f32.mrb[0].mxu0
      %v2048 = vadd.f32 %v1809, %v2047
      %v2049 = vpop.f32.mrb[0].mxu0
      %v2050 = vadd.f32 %v1809, %v2049
      %2051 = vdwg.mxu0
      %2052 = vmatprep.subr.mxu0 %v1772
      %2053 = vmatpush1.msra.mxu0 %v1771
      %2054 = vmatprep.subr.mxu0 %v1780
      %2055 = vmatpush1.msra.mxu0 %v1779
      %2056 = vmatprep.subr.mxu0 %v1788
      %2057 = vmatpush1.msra.mxu0 %v1787
      %2058 = vmatprep.subr.mxu0 %v1796
      %2059 = vmatpush1.msra.mxu0 %v1795
      %2060 = vmatprep.subr.mxu0 %v1837
      %2061 = vmatpush1.msra.mxu0 %v1834
      %2062 = vmatprep.subr.mxu0 0.0
      %2063 = vmatpush1.msra.mxu0 0.0
      %2064 = vmatprep.subr.mxu0 0.0
      %2065 = vmatpush1.msra.mxu0 0.0
      %2066 = vmatprep.subr.mxu0 0.0
      %2067 = vmatpush1.msra.mxu0 0.0
      %2068 = vmatprep.subr.mxu0 0.0
      %2069 = vmatpush1.msra.mxu0 0.0
      %2070 = vmatprep.subr.mxu0 0.0
      %2071 = vmatpush1.msra.mxu0 0.0
      %2072 = vmatprep.subr.mxu0 0.0
      %2073 = vmatpush1.msra.mxu0 0.0
      %2074 = vmatprep.subr.mxu0 0.0
      %2075 = vmatpush1.msra.mxu0 0.0
      %2076 = vmatprep.subr.mxu0 0.0
      %2077 = vmatpush1.msra.mxu0 0.0
      %2078 = vmatprep.subr.mxu0 0.0
      %2079 = vmatpush1.msra.mxu0 0.0
      %2080 = vmatprep.subr.mxu0 0.0
      %2081 = vmatpush1.msra.mxu0 0.0
      %2082 = vmatprep.subr.mxu0 0.0
      %2083 = vmatpush1.msra.mxu0 0.0
      %2084 = vmatprep.subr.mxu0 0.0
      %2085 = vmatpush1.msra.mxu0 0.0
      %2086 = vmatprep.subr.mxu0 0.0
      %2087 = vmatpush1.msra.mxu0 0.0
      %2088 = vmatprep.subr.mxu0 0.0
      %2089 = vmatpush1.msra.mxu0 0.0
      %2090 = vmatprep.subr.mxu0 0.0
      %2091 = vmatpush1.msra.mxu0 0.0
      %2092 = vmatprep.subr.mxu0 0.0
      %2093 = vmatpush1.msra.mxu0 0.0
      %2094 = vmatprep.subr.mxu0 0.0
      %2095 = vmatpush1.msra.mxu0 0.0
      %2096 = vmatprep.subr.mxu0 0.0
      %2097 = vmatpush1.msra.mxu0 0.0
      %2098 = vmatprep.subr.mxu0 0.0
      %2099 = vmatpush1.msra.mxu0 0.0
      %2100 = vmatprep.subr.mxu0 0.0
      %2101 = vmatpush1.msra.mxu0 0.0
      %2102 = vmatprep.subr.mxu0 0.0
      %2103 = vmatpush1.msra.mxu0 0.0
      %2104 = vmatprep.subr.mxu0 0.0
      %2105 = vmatpush1.msra.mxu0 0.0
      %2106 = vmatprep.subr.mxu0 0.0
      %2107 = vmatpush1.msra.mxu0 0.0
      %2108 = vmatprep.subr.mxu0 0.0
      %2109 = vmatpush1.msra.mxu0 0.0
      %2110 = vmatprep.subr.mxu0 0.0
      %2111 = vmatpush1.msra.mxu0 0.0
      %2112 = vmatprep.subr.mxu0 0.0
      %2113 = vmatpush1.msra.mxu0 0.0
      %2114 = vmatprep.subr.mxu0 0.0
      %2115 = vmatpush1.msra.mxu0 0.0
      %2116 = vmatprep.mubr.f32.mxu0 0.0
      %2117 = vmatmul.mubr.f32.gmra.mrb[0].mxu0 %v1813
      %v2118 = vpop.f32.mrb[0].mxu0
      %v2119 = vadd.f32 %v1809, %v2118
      %v2120 = vpop.f32.mrb[0].mxu0
      %v2121 = vadd.f32 %v1809, %v2120
      %2122 = vdwg.mxu0
      %2123 = vst [vmem:[%s224] sm:$0xff] %v1906
      %2124 = vst [vmem:[%s224 + $0x8] sm:$0xff] %v1908
      %2125 = vst [vmem:[%s224 + $0x10] sm:$0xff] %v1977
      %2126 = vst [vmem:[%s224 + $0x18] sm:$0xff] %v1979
      %2127 = vst [vmem:[%s224 + $0x20] sm:$0xff] %v2048
      %2128 = vst [vmem:[%s224 + $0x28] sm:$0xff] %v2050
      %2129 = vst [vmem:[%s224 + $0x30] sm:$0xff] %v2119
      %2130 = vst [vmem:[%s224 + $0x38] sm:$0xff] %v2121
      %p2131 = scmp.lt.s32.totalorder %s16, 1
      %s2132 = scalar_select %p2131, %s16, 1
      %s2133 = smul.addr %s2132, 8
      %s2134 = smul.addr %s2133, 8
      %s2135 = scalar_lea.vmem %s5, %s2134
      // Predicated region
      $region41: #{interpolate_conv_upsample.1} parent=39 // pred_check
        %p2136 = pneg %p144
      $region42: #{interpolate_conv_upsample.1} parent=39 // pred_check_branch
        %2138 = sbr.rel (%p2136) target = $region44
      $region43: #{interpolate_conv_upsample.1} parent=39 // pred_region
        _
      $region44: #{interpolate_conv_upsample.1} parent=39 // pred_fallthru
        _
    $region40: #{interpolate_conv_upsample.1} parent=5 // pred_fallthru
      _
    %p2139 = scmp.le.s32.totalorder 2, %s11
    // Predicated region
    $region45: #{interpolate_conv_upsample.1} parent=5 // pred_check
      %p2140 = pneg %p2139
    $region46: #{interpolate_conv_upsample.1} parent=5 // pred_check_branch
      %2142 = sbr.rel (%p2140) target = $region48
    $region47: #{interpolate_conv_upsample.1} parent=5 // pred_region
      %s2143 = ssub.s32 %s11, 2
      // Predicated region
      $region49: #{interpolate_conv_upsample.1} parent=47 // pred_check
        %p2144 = pneg %p150
      $region50: #{interpolate_conv_upsample.1} parent=47 // pred_check_branch
        %2146 = sbr.rel (%p2144) target = $region52
      $region51: #{interpolate_conv_upsample.1} parent=47 // pred_region
        %p2147 = scmp.lt.s32.totalorder %s17, 1
        %s2148 = scalar_select %p2147, %s17, 1
        %s2149 = smul.addr %s2148, 8
        %s2150 = smul.addr %s2149, 8
        %s2151 = scalar_lea.vmem %s5, %s2150
      $region52: #{interpolate_conv_upsample.1} parent=47 // pred_fallthru
        _
    $region48: #{interpolate_conv_upsample.1} parent=5 // pred_fallthru
      _
  $region6: #{interpolate_conv_upsample.1} parent=0 // loop_footer
    %s15 = sadd.s32 1, %s11
  $region7: #{interpolate_conv_upsample.1} parent=0 // loop_footer_branch
    %10 = sbr.rel target = $region3
  $region8: #{interpolate_conv_upsample.1} parent=0 // loop_exit
    _

</llo_original>
